<compile_context>
chip_gen: v5e
topology: v5e:2x2
jax: 0.10.0
libtpu: 0.0.40
codegen_flags: <defaults>
</compile_context>

<pallas_src>
import functools

import jax
import jax.numpy as jnp
from jax import lax
from jax.experimental import pallas as pl
from jax.experimental.pallas import tpu as pltpu

TOTAL_LENGTH = 70  # matches pad_packed_sequence(..., total_length=70)


# ----------------------------------------------------------------------------
# Pallas kernel: one bidirectional GRU layer (both directions fused)
# ----------------------------------------------------------------------------
def _bigru_layer_kernel(maxlen_ref, lens_ref, x_ref, wih_ref, whh_ref,
                        bgx_ref, bhn_ref, out_ref, hlast_ref,
                        gx_sc, hf_sc, hb_sc, *, seq_len, out_len, batch, hid):
    """One full bidirectional GRU layer.

    maxlen_ref: (1,)            SMEM  max(src_len) -> live trip count
    lens_ref:   (Bp, 1)         VMEM  per-sequence lengths (0 for padded rows)
    x_ref:      (T*Bp, D_in)    VMEM  f32 time-major activations, flattened
    wih_ref:    (2, D_in, 3H)   VMEM  bf16 per-direction W_ih^T, gates [r|z|n]
    whh_ref:    (2, H, 3H)      VMEM  bf16 per-direction W_hh^T, gates [r|z|n]
    bgx_ref:    (2, 1, 3H)      VMEM  f32 biases folded into the input proj
    bhn_ref:    (2, 1, H)       VMEM  f32 b_hn (scaled by r, cannot be folded)
    out_ref:    (T_out, Bp, 2H) VMEM  fwd -> lanes [0,H), bwd -> lanes [H,2H)
    hlast_ref:  (2, Bp, H)      VMEM  final hidden state per direction
    gx_sc:      (2*T*Bp, 3H)    VMEM  f32 input projections (fwd rows then bwd)
    hf_sc/hb_sc:(Bp, H)         VMEM  f32 running hidden states
    """
    n_steps = maxlen_ref[0]                    # = max(src_len), dynamic
    tb = seq_len * batch

    # ---- prologue: input projection for ALL timesteps, all gates fused -----
    xb = x_ref[...].astype(jnp.bfloat16)
    gx_sc[0:tb, :] = (jnp.dot(xb, wih_ref[0],
                              preferred_element_type=jnp.float32) + bgx_ref[0])
    gx_sc[tb:2 * tb, :] = (jnp.dot(xb, wih_ref[1],
                                   preferred_element_type=jnp.float32)
                           + bgx_ref[1])

    hf_sc[...] = jnp.zeros_like(hf_sc)
    hb_sc[...] = jnp.zeros_like(hb_sc)

    # loop-invariant loads / broadcasts, hoisted out of the serial loop
    whh_f = whh_ref[0]                                         # (H, 3H) bf16
    whh_b = whh_ref[1]
    bhn_f = jnp.broadcast_to(bhn_ref[0], (batch, hid))         # (Bp, H) f32
    bhn_b = jnp.broadcast_to(bhn_ref[1], (batch, hid))
    lens_row = jnp.broadcast_to(lens_ref[...], (batch, hid))   # (Bp, H) int32
    zero_row = jnp.zeros((batch, 2 * hid), jnp.float32)

    def cell(gx, h, whh, bhn_row):
        # single fused recurrent matmul for all three gates (bf16 -> f32 acc)
        g = jnp.dot(h.astype(jnp.bfloat16), whh,
                    preferred_element_type=jnp.float32)        # (Bp, 3H)
        r = jax.nn.sigmoid(gx[:, 0:hid] + g[:, 0:hid])
        z = jax.nn.sigmoid(gx[:, hid:2 * hid] + g[:, hid:2 * hid])
        n = jnp.tanh(gx[:, 2 * hid:3 * hid]
                     + r * (g[:, 2 * hid:3 * hid] + bhn_row))
        return n + z * (h - n)                                 # (1-z)*n + z*h

    def step(i, carry):
        t_f = i                              # forward walks 0 .. n-1
        t_b = n_steps - 1 - i                # backward walks n-1 .. 0
        row_f = pl.multiple_of(t_f * batch, batch)
        row_b = pl.multiple_of(tb + t_b * batch, batch)
        gx_f = gx_sc[pl.ds(row_f, batch), :]                   # (Bp, 3H)
        gx_b = gx_sc[pl.ds(row_b, batch), :]
        h_f = hf_sc[...]
        h_b = hb_sc[...]

        hf_new = cell(gx_f, h_f, whh_f, bhn_f)
        hb_new = cell(gx_b, h_b, whh_b, bhn_b)

        # pack_padded_sequence semantics: freeze h and zero the output once
        # t >= len[b]; the backward pass therefore starts each sequence at its
        # own last valid timestep with h = 0.
        m_f = lens_row > t_f
        m_b = lens_row > t_b
        hf_sc[...] = jnp.where(m_f, hf_new, h_f)
        hb_sc[...] = jnp.where(m_b, hb_new, h_b)
        out_ref[t_f, :, pl.ds(0, hid)] = jnp.where(m_f, hf_new, 0.0)
        out_ref[t_b, :, pl.ds(hid, hid)] = jnp.where(m_b, hb_new, 0.0)
        return carry

    lax.fori_loop(0, n_steps, step, 0)       # dynamic trip count = max(len)

    # only zero the padded tail rows t in [max_len, T_out); all t < max_len
    # were fully written (both lane halves) by the recurrence loop.
    def zero_tail(t, carry):
        out_ref[t, :, :] = zero_row
        return carry

    lax.fori_loop(n_steps, out_len, zero_tail, 0)

    hlast_ref[0] = hf_sc[...]
    hlast_ref[1] = hb_sc[...]


# ----------------------------------------------------------------------------
# Pallas wrapper: one fused bidirectional layer (single invocation, no grid)
# ----------------------------------------------------------------------------
def bigru_layer(x_flat, lens_col, max_len, wih, whh, bgx, bhn,
                *, seq_len, out_len, batch, hid):
    kernel = functools.partial(_bigru_layer_kernel, seq_len=seq_len,
                               out_len=out_len, batch=batch, hid=hid)
    return pl.pallas_call(
        kernel,
        out_shape=(jax.ShapeDtypeStruct((out_len, batch, 2 * hid), jnp.float32),
                   jax.ShapeDtypeStruct((2, batch, hid), jnp.float32)),
        in_specs=[
            pl.BlockSpec(memory_space=pltpu.MemorySpace.SMEM),   # max_len (1,)
            pl.BlockSpec(memory_space=pltpu.MemorySpace.VMEM),   # lens (Bp,1)
            pl.BlockSpec(memory_space=pltpu.MemorySpace.VMEM),   # x_flat
            pl.BlockSpec(memory_space=pltpu.MemorySpace.VMEM),   # W_ih^T bf16
            pl.BlockSpec(memory_space=pltpu.MemorySpace.VMEM),   # W_hh^T bf16
            pl.BlockSpec(memory_space=pltpu.MemorySpace.VMEM),   # folded biases
            pl.BlockSpec(memory_space=pltpu.MemorySpace.VMEM),   # b_hn
        ],
        out_specs=(pl.BlockSpec(memory_space=pltpu.MemorySpace.VMEM),
                   pl.BlockSpec(memory_space=pltpu.MemorySpace.VMEM)),
        scratch_shapes=[
            pltpu.VMEM((2 * seq_len * batch, 3 * hid), jnp.float32),  # gx
            pltpu.VMEM((batch, hid), jnp.float32),                    # h fwd
            pltpu.VMEM((batch, hid), jnp.float32),                    # h bwd
        ],
    )(max_len, lens_col, x_flat, wih, whh, bgx, bhn)


# ----------------------------------------------------------------------------
# Weight re-layout: PyTorch (3H, D) weights -> fused kernel layout
# ----------------------------------------------------------------------------
def _prep_gru_layer(layer_params, hid_dim):
    """Returns (stacked over direction on axis 0):
       wih (2, D_in, 3H) bf16, whh (2, H, 3H) bf16, bgx (2, 1, 3H) f32,
       bhn (2, 1, H) f32."""
    h = hid_dim
    wih, whh, bgx, bhn = [], [], [], []
    for (w_ih, w_hh, b_ih, b_hh) in layer_params:        # per direction
        wih.append(w_ih.T.astype(jnp.bfloat16))          # (D_in, 3H) [r|z|n]
        whh.append(w_hh.T.astype(jnp.bfloat16))          # (H, 3H)    [r|z|n]
        bgx.append(jnp.concatenate([b_ih[:h] + b_hh[:h],            # r
                                    b_ih[h:2 * h] + b_hh[h:2 * h],  # z
                                    b_ih[2 * h:]]).reshape(1, 3 * h))  # n (b_in)
        bhn.append(b_hh[2 * h:].reshape(1, h))                         # b_hn
    return jnp.stack(wih), jnp.stack(whh), jnp.stack(bgx), jnp.stack(bhn)


# ----------------------------------------------------------------------------
# Parameter init (deterministic, shapes match the PyTorch module)
# ----------------------------------------------------------------------------
def _uniform(key, shape, scale):
    return jax.random.uniform(key, shape, jnp.float32, -scale, scale)


def init_params(key, input_dim, emb_dim, hid_dim, n_layers):
    keys = iter(jax.random.split(key, 4 + n_layers * 2 * 4 + 2))
    p = {"embedding": 0.1 * jax.random.normal(next(keys), (input_dim, emb_dim),
                                              jnp.float32)}
    scale = 1.0 / float(hid_dim) ** 0.5
    p["gru"] = []
    for layer in range(n_layers):
        d_in = emb_dim if layer == 0 else 2 * hid_dim
        layer_p = []
        for _direction in range(2):
            w_ih = _uniform(next(keys), (3 * hid_dim, d_in), scale)
            w_hh = _uniform(next(keys), (3 * hid_dim, hid_dim), scale)
            b_ih = _uniform(next(keys), (3 * hid_dim,), scale)
            b_hh = _uniform(next(keys), (3 * hid_dim,), scale)
            layer_p.append((w_ih, w_hh, b_ih, b_hh))
        p["gru"].append(layer_p)
    fc_scale = 1.0 / float(2 * hid_dim) ** 0.5
    p["fc_w"] = _uniform(next(keys), (hid_dim, 2 * hid_dim), fc_scale)
    p["fc_b"] = _uniform(next(keys), (hid_dim,), fc_scale)
    return p


# ----------------------------------------------------------------------------
# Encoder forward (matches Encoder.forward)
# ----------------------------------------------------------------------------
@functools.partial(jax.jit, static_argnums=(3, 4))
def encoder_forward(params, src, src_len, hid_dim, n_layers):
    B, T = src.shape
    assert T <= TOTAL_LENGTH
    Bp = ((B + 7) // 8) * 8                  # pad batch to a sublane multiple

    # embedding lookup (glue) + eval-mode dropout (identity)
    emb = jnp.take(params["embedding"], src, axis=0).astype(jnp.float32)

    # time-major activations, batch padded; padded rows get length 0 so the
    # in-kernel mask keeps their hidden state and outputs at exactly 0.
    x = jnp.transpose(emb, (1, 0, 2))                                 # (T,B,E)
    if Bp != B:
        x = jnp.pad(x, ((0, 0), (0, Bp - B), (0, 0)))
    lens = jnp.zeros((Bp,), jnp.int32).at[:B].set(src_len.astype(jnp.int32))
    lens_col = lens.reshape(Bp, 1)                                    # VMEM
    max_len = jnp.max(lens).reshape(1)                                # SMEM

    out = None
    h_last = None
    for layer in range(n_layers):
        wih, whh, bgx, bhn = _prep_gru_layer(params["gru"][layer], hid_dim)
        last = layer == n_layers - 1
        t_out = TOTAL_LENGTH if last else T   # last layer writes padded output
        out, h_last = bigru_layer(
            x.reshape(T * Bp, x.shape[-1]), lens_col, max_len,
            wih, whh, bgx, bhn,
            seq_len=T, out_len=t_out, batch=Bp, hid=hid_dim)
        if not last:
            x = out                           # (T, Bp, 2H): fwd|bwd already fused

    # single transpose at the very end; outputs already padded to length 70
    outputs = jnp.transpose(out, (1, 0, 2))[:B]                       # (B,70,2H)

    # tanh(fc(cat(hidden[-2], hidden[-1]))) -- tiny, intentionally left to XLA
    h_cat = jnp.concatenate([h_last[0, :B], h_last[1, :B]], axis=-1)  # (B, 2H)
    hidden = jnp.tanh(h_cat @ params["fc_w"].T + params["fc_b"])      # (B, H)
    return hidden, outputs


# ----------------------------------------------------------------------------
# Pure-JAX (XLA) reference with identical packed-GRU semantics, for validation
# ----------------------------------------------------------------------------
def _ref_encoder_forward(params, src, src_len, hid_dim, n_layers):
    hp = jax.lax.Precision.HIGHEST
    B, T = src.shape
    x = jnp.take(params["embedding"], src, axis=0).astype(jnp.float32)
    lens = src_len.astype(jnp.int32)
    h_lasts = []
    for layer in range(n_layers):
        outs, h_lasts = [], []
        for direction in range(2):
            w_ih, w_hh, b_ih, b_hh = params["gru"][layer][direction]
            h = jnp.zeros((B, hid_dim), jnp.float32)
            out_t = [None] * T
            order = range(T) if direction == 0 else range(T - 1, -1, -1)
            for t in order:
                gx = jnp.dot(x[:, t, :], w_ih.T, precision=hp) + b_ih
                gh = jnp.dot(h, w_hh.T, precision=hp) + b_hh
                r = jax.nn.sigmoid(gx[:, :hid_dim] + gh[:, :hid_dim])
                z = jax.nn.sigmoid(gx[:, hid_dim:2 * hid_dim]
                                   + gh[:, hid_dim:2 * hid_dim])
                n = jnp.tanh(gx[:, 2 * hid_dim:] + r * gh[:, 2 * hid_dim:])
                h_new = (1.0 - z) * n + z * h
                valid = (t < lens)[:, None]
                h = jnp.where(valid, h_new, h)
                out_t[t] = jnp.where(valid, h_new, 0.0)
            outs.append(jnp.stack(out_t, axis=1))
            h_lasts.append(h)
        x = jnp.concatenate(outs, axis=-1)
    outputs = jnp.zeros((B, TOTAL_LENGTH, 2 * hid_dim),
                        jnp.float32).at[:, :T, :].set(x)
    h_cat = jnp.concatenate(h_lasts, axis=-1)
    hidden = jnp.tanh(jnp.dot(h_cat, params["fc_w"].T, precision=hp)
                      + params["fc_b"])
    return hidden, outputs


# ----------------------------------------------------------------------------
if __name__ == "__main__":
    INPUT_DIM, EMB_DIM, HID_DIM, N_LAYERS = 50, 16, 32, 2
    B, T = 2, 8

    key = jax.random.PRNGKey(0)
    pkey, skey = jax.random.split(key)
    params = init_params(pkey, INPUT_DIM, EMB_DIM, HID_DIM, N_LAYERS)

    src = jax.random.randint(skey, (B, T), 0, INPUT_DIM, dtype=jnp.int32)
    src_len = jnp.array([8, 5], dtype=jnp.int32)

    hidden, outputs = encoder_forward(params, src, src_len, HID_DIM, N_LAYERS)
    jax.block_until_ready((hidden, outputs))

    assert hidden.shape == (B, HID_DIM)
    assert outputs.shape == (B, TOTAL_LENGTH, 2 * HID_DIM)

    ref_hidden, ref_outputs = _ref_encoder_forward(params, src, src_len,
                                                   HID_DIM, N_LAYERS)
    # bf16 MXU operands vs f32 reference: 2e-2 leaves ample headroom here.
    assert float(jnp.max(jnp.abs(hidden - ref_hidden))) < 2e-2
    assert float(jnp.max(jnp.abs(outputs - ref_outputs))) < 2e-2
    # pad_packed_sequence semantics: positions past each length are exactly 0
    assert float(jnp.max(jnp.abs(outputs[1, 5:, :]))) == 0.0

    print("KERNEL_OK")
</pallas_src>

<mosaic_0001>
module attributes {stable_mosaic.version = 11 : i64} {
  func.func @_bigru_layer_kernel(%arg0: memref<1xi32, #tpu.memory_space<smem>>, %arg1: memref<8x1xi32, #tpu.memory_space<vmem>>, %arg2: memref<64x64xf32, #tpu.memory_space<vmem>>, %arg3: memref<2x64x96xbf16, #tpu.memory_space<vmem>>, %arg4: memref<2x32x96xbf16, #tpu.memory_space<vmem>>, %arg5: memref<2x1x96xf32, #tpu.memory_space<vmem>>, %arg6: memref<2x1x32xf32, #tpu.memory_space<vmem>>, %arg7: memref<70x8x64xf32, #tpu.memory_space<vmem>>, %arg8: memref<2x8x32xf32, #tpu.memory_space<vmem>>, %arg9: memref<128x96xf32, #tpu.memory_space<vmem>>, %arg10: memref<8x32xf32, #tpu.memory_space<vmem>>, %arg11: memref<8x32xf32, #tpu.memory_space<vmem>>) attributes {dimension_semantics = [], scalar_prefetch = 0 : i64, scratch_operands = 3 : i64, tpu.core_type = #tpu.core_type<tc>} {
    %c0 = arith.constant 0 : index
    %0 = memref.load %arg0[%c0] : memref<1xi32, #tpu.memory_space<smem>>
    %c0_0 = arith.constant 0 : index
    %c0_1 = arith.constant 0 : index
    %1 = vector.load %arg2[%c0_0, %c0_1] : memref<64x64xf32, #tpu.memory_space<vmem>>, vector<64x64xf32>
    %2 = arith.truncf %1 : vector<64x64xf32> to vector<64x64xbf16>
    %c0_2 = arith.constant 0 : index
    %c0_3 = arith.constant 0 : index
    %c0_4 = arith.constant 0 : index
    %3 = vector.load %arg3[%c0_2, %c0_3, %c0_4] : memref<2x64x96xbf16, #tpu.memory_space<vmem>>, vector<1x64x96xbf16>
    %4 = vector.shape_cast %3 : vector<1x64x96xbf16> to vector<64x96xbf16>
    %cst = arith.constant dense<0.000000e+00> : vector<64x96xf32>
    %5 = tpu.matmul %2, %4, %cst {dimension_numbers = #tpu.dot_dimension_numbers<[1], [0], [0], [1], [0, 0, 1, 1], [], []>} : vector<64x64xbf16>, vector<64x96xbf16>, vector<64x96xf32> -> vector<64x96xf32>
    %c0_5 = arith.constant 0 : index
    %c0_6 = arith.constant 0 : index
    %c0_7 = arith.constant 0 : index
    %6 = vector.load %arg5[%c0_5, %c0_6, %c0_7] : memref<2x1x96xf32, #tpu.memory_space<vmem>>, vector<1x1x96xf32>
    %7 = vector.shape_cast %6 : vector<1x1x96xf32> to vector<1x96xf32>
    %8 = vector.broadcast %7 : vector<1x96xf32> to vector<64x96xf32>
    %9 = arith.addf %5, %8 : vector<64x96xf32>
    %c0_8 = arith.constant 0 : index
    %c0_9 = arith.constant 0 : index
    %10 = vector.load %arg9[%c0_8, %c0_9] : memref<128x96xf32, #tpu.memory_space<vmem>>, vector<64x96xf32>
    tpu.vector_store %arg9[%c0_8, %c0_9], %9 {strides = array<i32>} : memref<128x96xf32, #tpu.memory_space<vmem>>, vector<64x96xf32>,
    %c1 = arith.constant 1 : index
    %c0_10 = arith.constant 0 : index
    %c0_11 = arith.constant 0 : index
    %11 = vector.load %arg3[%c1, %c0_10, %c0_11] : memref<2x64x96xbf16, #tpu.memory_space<vmem>>, vector<1x64x96xbf16>
    %12 = vector.shape_cast %11 : vector<1x64x96xbf16> to vector<64x96xbf16>
    %cst_12 = arith.constant dense<0.000000e+00> : vector<64x96xf32>
    %13 = tpu.matmul %2, %12, %cst_12 {dimension_numbers = #tpu.dot_dimension_numbers<[1], [0], [0], [1], [0, 0, 1, 1], [], []>} : vector<64x64xbf16>, vector<64x96xbf16>, vector<64x96xf32> -> vector<64x96xf32>
    %c1_13 = arith.constant 1 : index
    %c0_14 = arith.constant 0 : index
    %c0_15 = arith.constant 0 : index
    %14 = vector.load %arg5[%c1_13, %c0_14, %c0_15] : memref<2x1x96xf32, #tpu.memory_space<vmem>>, vector<1x1x96xf32>
    %15 = vector.shape_cast %14 : vector<1x1x96xf32> to vector<1x96xf32>
    %16 = vector.broadcast %15 : vector<1x96xf32> to vector<64x96xf32>
    %17 = arith.addf %13, %16 : vector<64x96xf32>
    %c64 = arith.constant 64 : index
    %c0_16 = arith.constant 0 : index
    %18 = vector.load %arg9[%c64, %c0_16] : memref<128x96xf32, #tpu.memory_space<vmem>>, vector<64x96xf32>
    tpu.vector_store %arg9[%c64, %c0_16], %17 {strides = array<i32>} : memref<128x96xf32, #tpu.memory_space<vmem>>, vector<64x96xf32>,
    %cst_17 = arith.constant 0.000000e+00 : f32
    %19 = vector.broadcast %cst_17 : f32 to vector<8x32xf32>
    %c0_18 = arith.constant 0 : index
    %c0_19 = arith.constant 0 : index
    %20 = vector.load %arg10[%c0_18, %c0_19] : memref<8x32xf32, #tpu.memory_space<vmem>>, vector<8x32xf32>
    tpu.vector_store %arg10[%c0_18, %c0_19], %19 {strides = array<i32>} : memref<8x32xf32, #tpu.memory_space<vmem>>, vector<8x32xf32>,
    %cst_20 = arith.constant 0.000000e+00 : f32
    %21 = vector.broadcast %cst_20 : f32 to vector<8x32xf32>
    %c0_21 = arith.constant 0 : index
    %c0_22 = arith.constant 0 : index
    %22 = vector.load %arg11[%c0_21, %c0_22] : memref<8x32xf32, #tpu.memory_space<vmem>>, vector<8x32xf32>
    tpu.vector_store %arg11[%c0_21, %c0_22], %21 {strides = array<i32>} : memref<8x32xf32, #tpu.memory_space<vmem>>, vector<8x32xf32>,
    %c0_23 = arith.constant 0 : index
    %c0_24 = arith.constant 0 : index
    %c0_25 = arith.constant 0 : index
    %23 = vector.load %arg4[%c0_23, %c0_24, %c0_25] : memref<2x32x96xbf16, #tpu.memory_space<vmem>>, vector<1x32x96xbf16>
    %24 = vector.shape_cast %23 : vector<1x32x96xbf16> to vector<32x96xbf16>
    %c1_26 = arith.constant 1 : index
    %c0_27 = arith.constant 0 : index
    %c0_28 = arith.constant 0 : index
    %25 = vector.load %arg4[%c1_26, %c0_27, %c0_28] : memref<2x32x96xbf16, #tpu.memory_space<vmem>>, vector<1x32x96xbf16>
    %26 = vector.shape_cast %25 : vector<1x32x96xbf16> to vector<32x96xbf16>
    %c0_29 = arith.constant 0 : index
    %c0_30 = arith.constant 0 : index
    %c0_31 = arith.constant 0 : index
    %27 = vector.load %arg6[%c0_29, %c0_30, %c0_31] : memref<2x1x32xf32, #tpu.memory_space<vmem>>, vector<1x1x32xf32>
    %28 = vector.shape_cast %27 : vector<1x1x32xf32> to vector<1x32xf32>
    %29 = vector.shape_cast %28 : vector<1x32xf32> to vector<1x32xf32>
    %30 = vector.broadcast %29 : vector<1x32xf32> to vector<8x32xf32>
    %c1_32 = arith.constant 1 : index
    %c0_33 = arith.constant 0 : index
    %c0_34 = arith.constant 0 : index
    %31 = vector.load %arg6[%c1_32, %c0_33, %c0_34] : memref<2x1x32xf32, #tpu.memory_space<vmem>>, vector<1x1x32xf32>
    %32 = vector.shape_cast %31 : vector<1x1x32xf32> to vector<1x32xf32>
    %33 = vector.shape_cast %32 : vector<1x32xf32> to vector<1x32xf32>
    %34 = vector.broadcast %33 : vector<1x32xf32> to vector<8x32xf32>
    %c0_35 = arith.constant 0 : index
    %c0_36 = arith.constant 0 : index
    %35 = vector.load %arg1[%c0_35, %c0_36] : memref<8x1xi32, #tpu.memory_space<vmem>>, vector<8x1xi32>
    %36 = vector.shape_cast %35 : vector<8x1xi32> to vector<8x1xi32>
    %37 = vector.broadcast %36 : vector<8x1xi32> to vector<8x32xi32>
    %cst_37 = arith.constant 0.000000e+00 : f32
    %38 = vector.broadcast %cst_37 : f32 to vector<8x64xf32>
    %c0_i32 = arith.constant 0 : i32
    %c0_i32_38 = arith.constant 0 : i32
    %39 = arith.subi %0, %c0_i32_38 : i32
    %40 = arith.addi %c0_i32_38, %39 : i32
    %c1_i32 = arith.constant 1 : i32
    scf.for %arg12 = %c0_i32_38 to %40 step %c1_i32  : i32 {
      %c1_i32_51 = arith.constant 1 : i32
      %51 = arith.subi %0, %c1_i32_51 : i32
      %52 = arith.subi %51, %arg12 : i32
      %c8_i32 = arith.constant 8 : i32
      %53 = arith.muli %arg12, %c8_i32 : i32
      %54 = tpu.assume_multiple %53, 8 : i32
      %c8_i32_52 = arith.constant 8 : i32
      %55 = arith.muli %52, %c8_i32_52 : i32
      %c64_i32 = arith.constant 64 : i32
      %56 = arith.addi %c64_i32, %55 : i32
      %57 = tpu.assume_multiple %56, 8 : i32
      %58 = arith.index_cast %54 : i32 to index
      %c0_53 = arith.constant 0 : index
      %59 = vector.load %arg9[%58, %c0_53] : memref<128x96xf32, #tpu.memory_space<vmem>>, vector<8x96xf32>
      %60 = arith.index_cast %57 : i32 to index
      %c0_54 = arith.constant 0 : index
      %61 = vector.load %arg9[%60, %c0_54] : memref<128x96xf32, #tpu.memory_space<vmem>>, vector<8x96xf32>
      %c0_55 = arith.constant 0 : index
      %c0_56 = arith.constant 0 : index
      %62 = vector.load %arg10[%c0_55, %c0_56] : memref<8x32xf32, #tpu.memory_space<vmem>>, vector<8x32xf32>
      %c0_57 = arith.constant 0 : index
      %c0_58 = arith.constant 0 : index
      %63 = vector.load %arg11[%c0_57, %c0_58] : memref<8x32xf32, #tpu.memory_space<vmem>>, vector<8x32xf32>
      %64 = arith.truncf %62 : vector<8x32xf32> to vector<8x32xbf16>
      %cst_59 = arith.constant dense<0.000000e+00> : vector<8x96xf32>
      %65 = tpu.matmul %64, %24, %cst_59 {dimension_numbers = #tpu.dot_dimension_numbers<[1], [0], [0], [1], [0, 0, 1, 1], [], []>} : vector<8x32xbf16>, vector<32x96xbf16>, vector<8x96xf32> -> vector<8x96xf32>
      %66 = vector.extract_strided_slice %59 {offsets = [0, 0], sizes = [8, 32], strides = [1, 1]} : vector<8x96xf32> to vector<8x32xf32>
      %67 = vector.extract_strided_slice %65 {offsets = [0, 0], sizes = [8, 32], strides = [1, 1]} : vector<8x96xf32> to vector<8x32xf32>
      %68 = arith.addf %66, %67 : vector<8x32xf32>
      %69 = arith.negf %68 : vector<8x32xf32>
      %70 = math.exp %69 : vector<8x32xf32>
      %cst_60 = arith.constant 1.000000e+00 : f32
      %71 = vector.broadcast %cst_60 : f32 to vector<8x32xf32>
      %72 = arith.addf %71, %70 : vector<8x32xf32>
      %73 = arith.divf %71, %72 : vector<8x32xf32>
      %74 = vector.extract_strided_slice %59 {offsets = [0, 32], sizes = [8, 32], strides = [1, 1]} : vector<8x96xf32> to vector<8x32xf32>
      %75 = vector.extract_strided_slice %65 {offsets = [0, 32], sizes = [8, 32], strides = [1, 1]} : vector<8x96xf32> to vector<8x32xf32>
      %76 = arith.addf %74, %75 : vector<8x32xf32>
      %77 = arith.negf %76 : vector<8x32xf32>
      %78 = math.exp %77 : vector<8x32xf32>
      %cst_61 = arith.constant 1.000000e+00 : f32
      %79 = vector.broadcast %cst_61 : f32 to vector<8x32xf32>
      %80 = arith.addf %79, %78 : vector<8x32xf32>
      %81 = arith.divf %79, %80 : vector<8x32xf32>
      %82 = vector.extract_strided_slice %59 {offsets = [0, 64], sizes = [8, 32], strides = [1, 1]} : vector<8x96xf32> to vector<8x32xf32>
      %83 = vector.extract_strided_slice %65 {offsets = [0, 64], sizes = [8, 32], strides = [1, 1]} : vector<8x96xf32> to vector<8x32xf32>
      %84 = arith.addf %83, %30 : vector<8x32xf32>
      %85 = arith.mulf %73, %84 : vector<8x32xf32>
      %86 = arith.addf %82, %85 : vector<8x32xf32>
      %87 = math.tanh %86 : vector<8x32xf32>
      %88 = arith.subf %62, %87 : vector<8x32xf32>
      %89 = arith.mulf %81, %88 : vector<8x32xf32>
      %90 = arith.addf %87, %89 : vector<8x32xf32>
      %91 = arith.truncf %63 : vector<8x32xf32> to vector<8x32xbf16>
      %cst_62 = arith.constant dense<0.000000e+00> : vector<8x96xf32>
      %92 = tpu.matmul %91, %26, %cst_62 {dimension_numbers = #tpu.dot_dimension_numbers<[1], [0], [0], [1], [0, 0, 1, 1], [], []>} : vector<8x32xbf16>, vector<32x96xbf16>, vector<8x96xf32> -> vector<8x96xf32>
      %93 = vector.extract_strided_slice %61 {offsets = [0, 0], sizes = [8, 32], strides = [1, 1]} : vector<8x96xf32> to vector<8x32xf32>
      %94 = vector.extract_strided_slice %92 {offsets = [0, 0], sizes = [8, 32], strides = [1, 1]} : vector<8x96xf32> to vector<8x32xf32>
      %95 = arith.addf %93, %94 : vector<8x32xf32>
      %96 = arith.negf %95 : vector<8x32xf32>
      %97 = math.exp %96 : vector<8x32xf32>
      %cst_63 = arith.constant 1.000000e+00 : f32
      %98 = vector.broadcast %cst_63 : f32 to vector<8x32xf32>
      %99 = arith.addf %98, %97 : vector<8x32xf32>
      %100 = arith.divf %98, %99 : vector<8x32xf32>
      %101 = vector.extract_strided_slice %61 {offsets = [0, 32], sizes = [8, 32], strides = [1, 1]} : vector<8x96xf32> to vector<8x32xf32>
      %102 = vector.extract_strided_slice %92 {offsets = [0, 32], sizes = [8, 32], strides = [1, 1]} : vector<8x96xf32> to vector<8x32xf32>
      %103 = arith.addf %101, %102 : vector<8x32xf32>
      %104 = arith.negf %103 : vector<8x32xf32>
      %105 = math.exp %104 : vector<8x32xf32>
      %cst_64 = arith.constant 1.000000e+00 : f32
      %106 = vector.broadcast %cst_64 : f32 to vector<8x32xf32>
      %107 = arith.addf %106, %105 : vector<8x32xf32>
      %108 = arith.divf %106, %107 : vector<8x32xf32>
      %109 = vector.extract_strided_slice %61 {offsets = [0, 64], sizes = [8, 32], strides = [1, 1]} : vector<8x96xf32> to vector<8x32xf32>
      %110 = vector.extract_strided_slice %92 {offsets = [0, 64], sizes = [8, 32], strides = [1, 1]} : vector<8x96xf32> to vector<8x32xf32>
      %111 = arith.addf %110, %34 : vector<8x32xf32>
      %112 = arith.mulf %100, %111 : vector<8x32xf32>
      %113 = arith.addf %109, %112 : vector<8x32xf32>
      %114 = math.tanh %113 : vector<8x32xf32>
      %115 = arith.subf %63, %114 : vector<8x32xf32>
      %116 = arith.mulf %108, %115 : vector<8x32xf32>
      %117 = arith.addf %114, %116 : vector<8x32xf32>
      %118 = vector.broadcast %arg12 : i32 to vector<8x32xi32>
      %119 = arith.cmpi sgt, %37, %118 : vector<8x32xi32>
      %120 = vector.broadcast %52 : i32 to vector<8x32xi32>
      %121 = arith.cmpi sgt, %37, %120 : vector<8x32xi32>
      %122 = arith.select %119, %90, %62 : vector<8x32xi1>, vector<8x32xf32>
      %c0_65 = arith.constant 0 : index
      %c0_66 = arith.constant 0 : index
      %123 = vector.load %arg10[%c0_65, %c0_66] : memref<8x32xf32, #tpu.memory_space<vmem>>, vector<8x32xf32>
      tpu.vector_store %arg10[%c0_65, %c0_66], %122 {strides = array<i32>} : memref<8x32xf32, #tpu.memory_space<vmem>>, vector<8x32xf32>,
      %124 = arith.select %121, %117, %63 : vector<8x32xi1>, vector<8x32xf32>
      %c0_67 = arith.constant 0 : index
      %c0_68 = arith.constant 0 : index
      %125 = vector.load %arg11[%c0_67, %c0_68] : memref<8x32xf32, #tpu.memory_space<vmem>>, vector<8x32xf32>
      tpu.vector_store %arg11[%c0_67, %c0_68], %124 {strides = array<i32>} : memref<8x32xf32, #tpu.memory_space<vmem>>, vector<8x32xf32>,
      %cst_69 = arith.constant 0.000000e+00 : f32
      %126 = vector.broadcast %cst_69 : f32 to vector<8x32xf32>
      %127 = arith.select %119, %90, %126 : vector<8x32xi1>, vector<8x32xf32>
      %128 = arith.index_cast %arg12 : i32 to index
      %c0_70 = arith.constant 0 : index
      %c0_71 = arith.constant 0 : index
      %129 = vector.load %arg7[%128, %c0_70, %c0_71] : memref<70x8x64xf32, #tpu.memory_space<vmem>>, vector<1x8x32xf32>
      %130 = vector.shape_cast %129 : vector<1x8x32xf32> to vector<8x32xf32>
      %131 = vector.shape_cast %127 : vector<8x32xf32> to vector<1x8x32xf32>
      tpu.vector_store %arg7[%128, %c0_70, %c0_71], %131 {strides = array<i32>} : memref<70x8x64xf32, #tpu.memory_space<vmem>>, vector<1x8x32xf32>,
      %cst_72 = arith.constant 0.000000e+00 : f32
      %132 = vector.broadcast %cst_72 : f32 to vector<8x32xf32>
      %133 = arith.select %121, %117, %132 : vector<8x32xi1>, vector<8x32xf32>
      %134 = arith.index_cast %52 : i32 to index
      %c0_73 = arith.constant 0 : index
      %c32 = arith.constant 32 : index
      %135 = vector.load %arg7[%134, %c0_73, %c32] : memref<70x8x64xf32, #tpu.memory_space<vmem>>, vector<1x8x32xf32>
      %136 = vector.shape_cast %135 : vector<1x8x32xf32> to vector<8x32xf32>
      %137 = vector.shape_cast %133 : vector<8x32xf32> to vector<1x8x32xf32>
      tpu.vector_store %arg7[%134, %c0_73, %c32], %137 {strides = array<i32>} : memref<70x8x64xf32, #tpu.memory_space<vmem>>, vector<1x8x32xf32>,
    }
    %c0_i32_39 = arith.constant 0 : i32
    %c70_i32 = arith.constant 70 : i32
    %41 = arith.subi %c70_i32, %0 : i32
    %42 = arith.addi %0, %41 : i32
    %c1_i32_40 = arith.constant 1 : i32
    scf.for %arg12 = %0 to %42 step %c1_i32_40  : i32 {
      %51 = arith.index_cast %arg12 : i32 to index
      %c0_51 = arith.constant 0 : index
      %c0_52 = arith.constant 0 : index
      %52 = vector.load %arg7[%51, %c0_51, %c0_52] : memref<70x8x64xf32, #tpu.memory_space<vmem>>, vector<1x8x64xf32>
      %53 = vector.shape_cast %52 : vector<1x8x64xf32> to vector<8x64xf32>
      %54 = vector.shape_cast %38 : vector<8x64xf32> to vector<1x8x64xf32>
      tpu.vector_store %arg7[%51, %c0_51, %c0_52], %54 {strides = array<i32>} : memref<70x8x64xf32, #tpu.memory_space<vmem>>, vector<1x8x64xf32>,
    }
    %c0_41 = arith.constant 0 : index
    %c0_42 = arith.constant 0 : index
    %43 = vector.load %arg10[%c0_41, %c0_42] : memref<8x32xf32, #tpu.memory_space<vmem>>, vector<8x32xf32>
    %c0_43 = arith.constant 0 : index
    %c0_44 = arith.constant 0 : index
    %c0_45 = arith.constant 0 : index
    %44 = vector.load %arg8[%c0_43, %c0_44, %c0_45] : memref<2x8x32xf32, #tpu.memory_space<vmem>>, vector<1x8x32xf32>
    %45 = vector.shape_cast %44 : vector<1x8x32xf32> to vector<8x32xf32>
    %46 = vector.shape_cast %43 : vector<8x32xf32> to vector<1x8x32xf32>
    tpu.vector_store %arg8[%c0_43, %c0_44, %c0_45], %46 {strides = array<i32>} : memref<2x8x32xf32, #tpu.memory_space<vmem>>, vector<1x8x32xf32>,
    %c0_46 = arith.constant 0 : index
    %c0_47 = arith.constant 0 : index
    %47 = vector.load %arg11[%c0_46, %c0_47] : memref<8x32xf32, #tpu.memory_space<vmem>>, vector<8x32xf32>
    %c1_48 = arith.constant 1 : index
    %c0_49 = arith.constant 0 : index
    %c0_50 = arith.constant 0 : index
    %48 = vector.load %arg8[%c1_48, %c0_49, %c0_50] : memref<2x8x32xf32, #tpu.memory_space<vmem>>, vector<1x8x32xf32>
    %49 = vector.shape_cast %48 : vector<1x8x32xf32> to vector<8x32xf32>
    %50 = vector.shape_cast %47 : vector<8x32xf32> to vector<1x8x32xf32>
    tpu.vector_store %arg8[%c1_48, %c0_49, %c0_50], %50 {strides = array<i32>} : memref<2x8x32xf32, #tpu.memory_space<vmem>>, vector<1x8x32xf32>,
    return
  }
}

module attributes {stable_mosaic.version = 11 : i64} {
  func.func @_bigru_layer_kernel(%arg0: memref<1xi32, #tpu.memory_space<smem>>, %arg1: memref<8x1xi32, #tpu.memory_space<vmem>>, %arg2: memref<64x16xf32, #tpu.memory_space<vmem>>, %arg3: memref<2x16x96xbf16, #tpu.memory_space<vmem>>, %arg4: memref<2x32x96xbf16, #tpu.memory_space<vmem>>, %arg5: memref<2x1x96xf32, #tpu.memory_space<vmem>>, %arg6: memref<2x1x32xf32, #tpu.memory_space<vmem>>, %arg7: memref<8x8x64xf32, #tpu.memory_space<vmem>>, %arg8: memref<2x8x32xf32, #tpu.memory_space<vmem>>, %arg9: memref<128x96xf32, #tpu.memory_space<vmem>>, %arg10: memref<8x32xf32, #tpu.memory_space<vmem>>, %arg11: memref<8x32xf32, #tpu.memory_space<vmem>>) attributes {dimension_semantics = [], scalar_prefetch = 0 : i64, scratch_operands = 3 : i64, tpu.core_type = #tpu.core_type<tc>} {
    %c0 = arith.constant 0 : index
    %0 = memref.load %arg0[%c0] : memref<1xi32, #tpu.memory_space<smem>>
    %c0_0 = arith.constant 0 : index
    %c0_1 = arith.constant 0 : index
    %1 = vector.load %arg2[%c0_0, %c0_1] : memref<64x16xf32, #tpu.memory_space<vmem>>, vector<64x16xf32>
    %2 = arith.truncf %1 : vector<64x16xf32> to vector<64x16xbf16>
    %c0_2 = arith.constant 0 : index
    %c0_3 = arith.constant 0 : index
    %c0_4 = arith.constant 0 : index
    %3 = vector.load %arg3[%c0_2, %c0_3, %c0_4] : memref<2x16x96xbf16, #tpu.memory_space<vmem>>, vector<1x16x96xbf16>
    %4 = vector.shape_cast %3 : vector<1x16x96xbf16> to vector<16x96xbf16>
    %cst = arith.constant dense<0.000000e+00> : vector<64x96xf32>
    %5 = tpu.matmul %2, %4, %cst {dimension_numbers = #tpu.dot_dimension_numbers<[1], [0], [0], [1], [0, 0, 1, 1], [], []>} : vector<64x16xbf16>, vector<16x96xbf16>, vector<64x96xf32> -> vector<64x96xf32>
    %c0_5 = arith.constant 0 : index
    %c0_6 = arith.constant 0 : index
    %c0_7 = arith.constant 0 : index
    %6 = vector.load %arg5[%c0_5, %c0_6, %c0_7] : memref<2x1x96xf32, #tpu.memory_space<vmem>>, vector<1x1x96xf32>
    %7 = vector.shape_cast %6 : vector<1x1x96xf32> to vector<1x96xf32>
    %8 = vector.broadcast %7 : vector<1x96xf32> to vector<64x96xf32>
    %9 = arith.addf %5, %8 : vector<64x96xf32>
    %c0_8 = arith.constant 0 : index
    %c0_9 = arith.constant 0 : index
    %10 = vector.load %arg9[%c0_8, %c0_9] : memref<128x96xf32, #tpu.memory_space<vmem>>, vector<64x96xf32>
    tpu.vector_store %arg9[%c0_8, %c0_9], %9 {strides = array<i32>} : memref<128x96xf32, #tpu.memory_space<vmem>>, vector<64x96xf32>,
    %c1 = arith.constant 1 : index
    %c0_10 = arith.constant 0 : index
    %c0_11 = arith.constant 0 : index
    %11 = vector.load %arg3[%c1, %c0_10, %c0_11] : memref<2x16x96xbf16, #tpu.memory_space<vmem>>, vector<1x16x96xbf16>
    %12 = vector.shape_cast %11 : vector<1x16x96xbf16> to vector<16x96xbf16>
    %cst_12 = arith.constant dense<0.000000e+00> : vector<64x96xf32>
    %13 = tpu.matmul %2, %12, %cst_12 {dimension_numbers = #tpu.dot_dimension_numbers<[1], [0], [0], [1], [0, 0, 1, 1], [], []>} : vector<64x16xbf16>, vector<16x96xbf16>, vector<64x96xf32> -> vector<64x96xf32>
    %c1_13 = arith.constant 1 : index
    %c0_14 = arith.constant 0 : index
    %c0_15 = arith.constant 0 : index
    %14 = vector.load %arg5[%c1_13, %c0_14, %c0_15] : memref<2x1x96xf32, #tpu.memory_space<vmem>>, vector<1x1x96xf32>
    %15 = vector.shape_cast %14 : vector<1x1x96xf32> to vector<1x96xf32>
    %16 = vector.broadcast %15 : vector<1x96xf32> to vector<64x96xf32>
    %17 = arith.addf %13, %16 : vector<64x96xf32>
    %c64 = arith.constant 64 : index
    %c0_16 = arith.constant 0 : index
    %18 = vector.load %arg9[%c64, %c0_16] : memref<128x96xf32, #tpu.memory_space<vmem>>, vector<64x96xf32>
    tpu.vector_store %arg9[%c64, %c0_16], %17 {strides = array<i32>} : memref<128x96xf32, #tpu.memory_space<vmem>>, vector<64x96xf32>,
    %cst_17 = arith.constant 0.000000e+00 : f32
    %19 = vector.broadcast %cst_17 : f32 to vector<8x32xf32>
    %c0_18 = arith.constant 0 : index
    %c0_19 = arith.constant 0 : index
    %20 = vector.load %arg10[%c0_18, %c0_19] : memref<8x32xf32, #tpu.memory_space<vmem>>, vector<8x32xf32>
    tpu.vector_store %arg10[%c0_18, %c0_19], %19 {strides = array<i32>} : memref<8x32xf32, #tpu.memory_space<vmem>>, vector<8x32xf32>,
    %cst_20 = arith.constant 0.000000e+00 : f32
    %21 = vector.broadcast %cst_20 : f32 to vector<8x32xf32>
    %c0_21 = arith.constant 0 : index
    %c0_22 = arith.constant 0 : index
    %22 = vector.load %arg11[%c0_21, %c0_22] : memref<8x32xf32, #tpu.memory_space<vmem>>, vector<8x32xf32>
    tpu.vector_store %arg11[%c0_21, %c0_22], %21 {strides = array<i32>} : memref<8x32xf32, #tpu.memory_space<vmem>>, vector<8x32xf32>,
    %c0_23 = arith.constant 0 : index
    %c0_24 = arith.constant 0 : index
    %c0_25 = arith.constant 0 : index
    %23 = vector.load %arg4[%c0_23, %c0_24, %c0_25] : memref<2x32x96xbf16, #tpu.memory_space<vmem>>, vector<1x32x96xbf16>
    %24 = vector.shape_cast %23 : vector<1x32x96xbf16> to vector<32x96xbf16>
    %c1_26 = arith.constant 1 : index
    %c0_27 = arith.constant 0 : index
    %c0_28 = arith.constant 0 : index
    %25 = vector.load %arg4[%c1_26, %c0_27, %c0_28] : memref<2x32x96xbf16, #tpu.memory_space<vmem>>, vector<1x32x96xbf16>
    %26 = vector.shape_cast %25 : vector<1x32x96xbf16> to vector<32x96xbf16>
    %c0_29 = arith.constant 0 : index
    %c0_30 = arith.constant 0 : index
    %c0_31 = arith.constant 0 : index
    %27 = vector.load %arg6[%c0_29, %c0_30, %c0_31] : memref<2x1x32xf32, #tpu.memory_space<vmem>>, vector<1x1x32xf32>
    %28 = vector.shape_cast %27 : vector<1x1x32xf32> to vector<1x32xf32>
    %29 = vector.shape_cast %28 : vector<1x32xf32> to vector<1x32xf32>
    %30 = vector.broadcast %29 : vector<1x32xf32> to vector<8x32xf32>
    %c1_32 = arith.constant 1 : index
    %c0_33 = arith.constant 0 : index
    %c0_34 = arith.constant 0 : index
    %31 = vector.load %arg6[%c1_32, %c0_33, %c0_34] : memref<2x1x32xf32, #tpu.memory_space<vmem>>, vector<1x1x32xf32>
    %32 = vector.shape_cast %31 : vector<1x1x32xf32> to vector<1x32xf32>
    %33 = vector.shape_cast %32 : vector<1x32xf32> to vector<1x32xf32>
    %34 = vector.broadcast %33 : vector<1x32xf32> to vector<8x32xf32>
    %c0_35 = arith.constant 0 : index
    %c0_36 = arith.constant 0 : index
    %35 = vector.load %arg1[%c0_35, %c0_36] : memref<8x1xi32, #tpu.memory_space<vmem>>, vector<8x1xi32>
    %36 = vector.shape_cast %35 : vector<8x1xi32> to vector<8x1xi32>
    %37 = vector.broadcast %36 : vector<8x1xi32> to vector<8x32xi32>
    %cst_37 = arith.constant 0.000000e+00 : f32
    %38 = vector.broadcast %cst_37 : f32 to vector<8x64xf32>
    %c0_i32 = arith.constant 0 : i32
    %c0_i32_38 = arith.constant 0 : i32
    %39 = arith.subi %0, %c0_i32_38 : i32
    %40 = arith.addi %c0_i32_38, %39 : i32
    %c1_i32 = arith.constant 1 : i32
    scf.for %arg12 = %c0_i32_38 to %40 step %c1_i32  : i32 {
      %c1_i32_51 = arith.constant 1 : i32
      %51 = arith.subi %0, %c1_i32_51 : i32
      %52 = arith.subi %51, %arg12 : i32
      %c8_i32_52 = arith.constant 8 : i32
      %53 = arith.muli %arg12, %c8_i32_52 : i32
      %54 = tpu.assume_multiple %53, 8 : i32
      %c8_i32_53 = arith.constant 8 : i32
      %55 = arith.muli %52, %c8_i32_53 : i32
      %c64_i32 = arith.constant 64 : i32
      %56 = arith.addi %c64_i32, %55 : i32
      %57 = tpu.assume_multiple %56, 8 : i32
      %58 = arith.index_cast %54 : i32 to index
      %c0_54 = arith.constant 0 : index
      %59 = vector.load %arg9[%58, %c0_54] : memref<128x96xf32, #tpu.memory_space<vmem>>, vector<8x96xf32>
      %60 = arith.index_cast %57 : i32 to index
      %c0_55 = arith.constant 0 : index
      %61 = vector.load %arg9[%60, %c0_55] : memref<128x96xf32, #tpu.memory_space<vmem>>, vector<8x96xf32>
      %c0_56 = arith.constant 0 : index
      %c0_57 = arith.constant 0 : index
      %62 = vector.load %arg10[%c0_56, %c0_57] : memref<8x32xf32, #tpu.memory_space<vmem>>, vector<8x32xf32>
      %c0_58 = arith.constant 0 : index
      %c0_59 = arith.constant 0 : index
      %63 = vector.load %arg11[%c0_58, %c0_59] : memref<8x32xf32, #tpu.memory_space<vmem>>, vector<8x32xf32>
      %64 = arith.truncf %62 : vector<8x32xf32> to vector<8x32xbf16>
      %cst_60 = arith.constant dense<0.000000e+00> : vector<8x96xf32>
      %65 = tpu.matmul %64, %24, %cst_60 {dimension_numbers = #tpu.dot_dimension_numbers<[1], [0], [0], [1], [0, 0, 1, 1], [], []>} : vector<8x32xbf16>, vector<32x96xbf16>, vector<8x96xf32> -> vector<8x96xf32>
      %66 = vector.extract_strided_slice %59 {offsets = [0, 0], sizes = [8, 32], strides = [1, 1]} : vector<8x96xf32> to vector<8x32xf32>
      %67 = vector.extract_strided_slice %65 {offsets = [0, 0], sizes = [8, 32], strides = [1, 1]} : vector<8x96xf32> to vector<8x32xf32>
      %68 = arith.addf %66, %67 : vector<8x32xf32>
      %69 = arith.negf %68 : vector<8x32xf32>
      %70 = math.exp %69 : vector<8x32xf32>
      %cst_61 = arith.constant 1.000000e+00 : f32
      %71 = vector.broadcast %cst_61 : f32 to vector<8x32xf32>
      %72 = arith.addf %71, %70 : vector<8x32xf32>
      %73 = arith.divf %71, %72 : vector<8x32xf32>
      %74 = vector.extract_strided_slice %59 {offsets = [0, 32], sizes = [8, 32], strides = [1, 1]} : vector<8x96xf32> to vector<8x32xf32>
      %75 = vector.extract_strided_slice %65 {offsets = [0, 32], sizes = [8, 32], strides = [1, 1]} : vector<8x96xf32> to vector<8x32xf32>
      %76 = arith.addf %74, %75 : vector<8x32xf32>
      %77 = arith.negf %76 : vector<8x32xf32>
      %78 = math.exp %77 : vector<8x32xf32>
      %cst_62 = arith.constant 1.000000e+00 : f32
      %79 = vector.broadcast %cst_62 : f32 to vector<8x32xf32>
      %80 = arith.addf %79, %78 : vector<8x32xf32>
      %81 = arith.divf %79, %80 : vector<8x32xf32>
      %82 = vector.extract_strided_slice %59 {offsets = [0, 64], sizes = [8, 32], strides = [1, 1]} : vector<8x96xf32> to vector<8x32xf32>
      %83 = vector.extract_strided_slice %65 {offsets = [0, 64], sizes = [8, 32], strides = [1, 1]} : vector<8x96xf32> to vector<8x32xf32>
      %84 = arith.addf %83, %30 : vector<8x32xf32>
      %85 = arith.mulf %73, %84 : vector<8x32xf32>
      %86 = arith.addf %82, %85 : vector<8x32xf32>
      %87 = math.tanh %86 : vector<8x32xf32>
      %88 = arith.subf %62, %87 : vector<8x32xf32>
      %89 = arith.mulf %81, %88 : vector<8x32xf32>
      %90 = arith.addf %87, %89 : vector<8x32xf32>
      %91 = arith.truncf %63 : vector<8x32xf32> to vector<8x32xbf16>
      %cst_63 = arith.constant dense<0.000000e+00> : vector<8x96xf32>
      %92 = tpu.matmul %91, %26, %cst_63 {dimension_numbers = #tpu.dot_dimension_numbers<[1], [0], [0], [1], [0, 0, 1, 1], [], []>} : vector<8x32xbf16>, vector<32x96xbf16>, vector<8x96xf32> -> vector<8x96xf32>
      %93 = vector.extract_strided_slice %61 {offsets = [0, 0], sizes = [8, 32], strides = [1, 1]} : vector<8x96xf32> to vector<8x32xf32>
      %94 = vector.extract_strided_slice %92 {offsets = [0, 0], sizes = [8, 32], strides = [1, 1]} : vector<8x96xf32> to vector<8x32xf32>
      %95 = arith.addf %93, %94 : vector<8x32xf32>
      %96 = arith.negf %95 : vector<8x32xf32>
      %97 = math.exp %96 : vector<8x32xf32>
      %cst_64 = arith.constant 1.000000e+00 : f32
      %98 = vector.broadcast %cst_64 : f32 to vector<8x32xf32>
      %99 = arith.addf %98, %97 : vector<8x32xf32>
      %100 = arith.divf %98, %99 : vector<8x32xf32>
      %101 = vector.extract_strided_slice %61 {offsets = [0, 32], sizes = [8, 32], strides = [1, 1]} : vector<8x96xf32> to vector<8x32xf32>
      %102 = vector.extract_strided_slice %92 {offsets = [0, 32], sizes = [8, 32], strides = [1, 1]} : vector<8x96xf32> to vector<8x32xf32>
      %103 = arith.addf %101, %102 : vector<8x32xf32>
      %104 = arith.negf %103 : vector<8x32xf32>
      %105 = math.exp %104 : vector<8x32xf32>
      %cst_65 = arith.constant 1.000000e+00 : f32
      %106 = vector.broadcast %cst_65 : f32 to vector<8x32xf32>
      %107 = arith.addf %106, %105 : vector<8x32xf32>
      %108 = arith.divf %106, %107 : vector<8x32xf32>
      %109 = vector.extract_strided_slice %61 {offsets = [0, 64], sizes = [8, 32], strides = [1, 1]} : vector<8x96xf32> to vector<8x32xf32>
      %110 = vector.extract_strided_slice %92 {offsets = [0, 64], sizes = [8, 32], strides = [1, 1]} : vector<8x96xf32> to vector<8x32xf32>
      %111 = arith.addf %110, %34 : vector<8x32xf32>
      %112 = arith.mulf %100, %111 : vector<8x32xf32>
      %113 = arith.addf %109, %112 : vector<8x32xf32>
      %114 = math.tanh %113 : vector<8x32xf32>
      %115 = arith.subf %63, %114 : vector<8x32xf32>
      %116 = arith.mulf %108, %115 : vector<8x32xf32>
      %117 = arith.addf %114, %116 : vector<8x32xf32>
      %118 = vector.broadcast %arg12 : i32 to vector<8x32xi32>
      %119 = arith.cmpi sgt, %37, %118 : vector<8x32xi32>
      %120 = vector.broadcast %52 : i32 to vector<8x32xi32>
      %121 = arith.cmpi sgt, %37, %120 : vector<8x32xi32>
      %122 = arith.select %119, %90, %62 : vector<8x32xi1>, vector<8x32xf32>
      %c0_66 = arith.constant 0 : index
      %c0_67 = arith.constant 0 : index
      %123 = vector.load %arg10[%c0_66, %c0_67] : memref<8x32xf32, #tpu.memory_space<vmem>>, vector<8x32xf32>
      tpu.vector_store %arg10[%c0_66, %c0_67], %122 {strides = array<i32>} : memref<8x32xf32, #tpu.memory_space<vmem>>, vector<8x32xf32>,
      %124 = arith.select %121, %117, %63 : vector<8x32xi1>, vector<8x32xf32>
      %c0_68 = arith.constant 0 : index
      %c0_69 = arith.constant 0 : index
      %125 = vector.load %arg11[%c0_68, %c0_69] : memref<8x32xf32, #tpu.memory_space<vmem>>, vector<8x32xf32>
      tpu.vector_store %arg11[%c0_68, %c0_69], %124 {strides = array<i32>} : memref<8x32xf32, #tpu.memory_space<vmem>>, vector<8x32xf32>,
      %cst_70 = arith.constant 0.000000e+00 : f32
      %126 = vector.broadcast %cst_70 : f32 to vector<8x32xf32>
      %127 = arith.select %119, %90, %126 : vector<8x32xi1>, vector<8x32xf32>
      %128 = arith.index_cast %arg12 : i32 to index
      %c0_71 = arith.constant 0 : index
      %c0_72 = arith.constant 0 : index
      %129 = vector.load %arg7[%128, %c0_71, %c0_72] : memref<8x8x64xf32, #tpu.memory_space<vmem>>, vector<1x8x32xf32>
      %130 = vector.shape_cast %129 : vector<1x8x32xf32> to vector<8x32xf32>
      %131 = vector.shape_cast %127 : vector<8x32xf32> to vector<1x8x32xf32>
      tpu.vector_store %arg7[%128, %c0_71, %c0_72], %131 {strides = array<i32>} : memref<8x8x64xf32, #tpu.memory_space<vmem>>, vector<1x8x32xf32>,
      %cst_73 = arith.constant 0.000000e+00 : f32
      %132 = vector.broadcast %cst_73 : f32 to vector<8x32xf32>
      %133 = arith.select %121, %117, %132 : vector<8x32xi1>, vector<8x32xf32>
      %134 = arith.index_cast %52 : i32 to index
      %c0_74 = arith.constant 0 : index
      %c32 = arith.constant 32 : index
      %135 = vector.load %arg7[%134, %c0_74, %c32] : memref<8x8x64xf32, #tpu.memory_space<vmem>>, vector<1x8x32xf32>
      %136 = vector.shape_cast %135 : vector<1x8x32xf32> to vector<8x32xf32>
      %137 = vector.shape_cast %133 : vector<8x32xf32> to vector<1x8x32xf32>
      tpu.vector_store %arg7[%134, %c0_74, %c32], %137 {strides = array<i32>} : memref<8x8x64xf32, #tpu.memory_space<vmem>>, vector<1x8x32xf32>,
    }
    %c0_i32_39 = arith.constant 0 : i32
    %c8_i32 = arith.constant 8 : i32
    %41 = arith.subi %c8_i32, %0 : i32
    %42 = arith.addi %0, %41 : i32
    %c1_i32_40 = arith.constant 1 : i32
    scf.for %arg12 = %0 to %42 step %c1_i32_40  : i32 {
      %51 = arith.index_cast %arg12 : i32 to index
      %c0_51 = arith.constant 0 : index
      %c0_52 = arith.constant 0 : index
      %52 = vector.load %arg7[%51, %c0_51, %c0_52] : memref<8x8x64xf32, #tpu.memory_space<vmem>>, vector<1x8x64xf32>
      %53 = vector.shape_cast %52 : vector<1x8x64xf32> to vector<8x64xf32>
      %54 = vector.shape_cast %38 : vector<8x64xf32> to vector<1x8x64xf32>
      tpu.vector_store %arg7[%51, %c0_51, %c0_52], %54 {strides = array<i32>} : memref<8x8x64xf32, #tpu.memory_space<vmem>>, vector<1x8x64xf32>,
    }
    %c0_41 = arith.constant 0 : index
    %c0_42 = arith.constant 0 : index
    %43 = vector.load %arg10[%c0_41, %c0_42] : memref<8x32xf32, #tpu.memory_space<vmem>>, vector<8x32xf32>
    %c0_43 = arith.constant 0 : index
    %c0_44 = arith.constant 0 : index
    %c0_45 = arith.constant 0 : index
    %44 = vector.load %arg8[%c0_43, %c0_44, %c0_45] : memref<2x8x32xf32, #tpu.memory_space<vmem>>, vector<1x8x32xf32>
    %45 = vector.shape_cast %44 : vector<1x8x32xf32> to vector<8x32xf32>
    %46 = vector.shape_cast %43 : vector<8x32xf32> to vector<1x8x32xf32>
    tpu.vector_store %arg8[%c0_43, %c0_44, %c0_45], %46 {strides = array<i32>} : memref<2x8x32xf32, #tpu.memory_space<vmem>>, vector<1x8x32xf32>,
    %c0_46 = arith.constant 0 : index
    %c0_47 = arith.constant 0 : index
    %47 = vector.load %arg11[%c0_46, %c0_47] : memref<8x32xf32, #tpu.memory_space<vmem>>, vector<8x32xf32>
    %c1_48 = arith.constant 1 : index
    %c0_49 = arith.constant 0 : index
    %c0_50 = arith.constant 0 : index
    %48 = vector.load %arg8[%c1_48, %c0_49, %c0_50] : memref<2x8x32xf32, #tpu.memory_space<vmem>>, vector<1x8x32xf32>
    %49 = vector.shape_cast %48 : vector<1x8x32xf32> to vector<8x32xf32>
    %50 = vector.shape_cast %47 : vector<8x32xf32> to vector<1x8x32xf32>
    tpu.vector_store %arg8[%c1_48, %c0_49, %c0_50], %50 {strides = array<i32>} : memref<2x8x32xf32, #tpu.memory_space<vmem>>, vector<1x8x32xf32>,
    return
  }
}

</mosaic_0001>

<llo_original>
// kernel: encoder_forward.3
$region0: #{encoder_forward.3}
  #allocation0 [shape = 'u32[]', space=smem, size = 0x4, offset = 0x4, fixed_abs, tag = 'smem constant byte address 0x4 - core index']
  #allocation1 [shape = 'u32[72,128]{1,0:T(1,128)}', space=vmem, size = 0x9000, scoped, tag = 'internal scratch']
  #allocation2 [shape = 'f32[128,96]{1,0:T(8,128)}', space=vmem, size = 0x10000, scoped, tag = 'scratch operand']
  #allocation3 [shape = 'f32[8,32]{1,0:T(8,128)}', space=vmem, size = 0x1000, scoped, tag = 'scratch operand']
  #allocation4 [shape = 'f32[8,32]{1,0:T(8,128)}', space=vmem, size = 0x1000, scoped, tag = 'scratch operand']
  #allocation5 [shape = 's32[1]{0:T(128)S(6)}', space=smem, size = 0x200, scoped, tag = 'scoped memory for encoder_forward.3']
  %s0 = inlined_call_operand.<no memory space> [shape: s32[1], index: 0, kind: input, shape index: {}]
  %s1 = inlined_call_operand.vmem [shape: s32[8,1], index: 1, kind: input, shape index: {}]
  %s2 = inlined_call_operand.vmem [shape: f32[64,64], index: 2, kind: input, shape index: {}]
  %s3 = inlined_call_operand.vmem [shape: bf16[2,64,96], index: 3, kind: input, shape index: {}]
  %s4 = inlined_call_operand.vmem [shape: bf16[2,32,96], index: 4, kind: input, shape index: {}]
  %s5 = inlined_call_operand.vmem [shape: f32[2,1,96], index: 5, kind: input, shape index: {}]
  %s6 = inlined_call_operand.vmem [shape: f32[2,1,32], index: 6, kind: input, shape index: {}]
  %s7 = inlined_call_operand.vmem [shape: f32[70,8,64], index: 7, kind: output, shape index: {0}]
  %s8 = inlined_call_operand.vmem [shape: f32[2,8,32], index: 8, kind: output, shape index: {1}]
  %9 = xla_tuple %s7, %s8
  %s10 = sld [smem:[#allocation0]]
  $region60: #{encoder_forward.3} parent=0
    _
  %s12 = ssub.s32 1, %s10
  %s13 = scalar_select 0, %s12, %s10
  %14 = sst [smem:[#allocation5]] %s0
  // Predicated region
  $region2: #{encoder_forward.3} parent=0 // pred_check
    _
  $region3: #{encoder_forward.3} parent=0 // pred_check_branch
    %16 = sbr.rel (0) target = $region5
  $region4: #{encoder_forward.3} parent=0 // pred_region
    _
  $region5: #{encoder_forward.3} parent=0 // pred_fallthru
    _
  // Predicated region
  $region6: #{encoder_forward.3} parent=0 // pred_check
    _
  $region7: #{encoder_forward.3} parent=0 // pred_check_branch
    %18 = sbr.rel (0) target = $region9
  $region8: #{encoder_forward.3} parent=0 // pred_region
    _
  $region9: #{encoder_forward.3} parent=0 // pred_fallthru
    _
  // Predicated region
  $region10: #{encoder_forward.3} parent=0 // pred_check
    _
  $region11: #{encoder_forward.3} parent=0 // pred_check_branch
    %20 = sbr.rel (0) target = $region13
  $region12: #{encoder_forward.3} parent=0 // pred_region
    _
  $region13: #{encoder_forward.3} parent=0 // pred_fallthru
    _
  // Predicated region
  $region14: #{encoder_forward.3} parent=0 // pred_check
    _
  $region15: #{encoder_forward.3} parent=0 // pred_check_branch
    %22 = sbr.rel (0) target = $region17
  $region16: #{encoder_forward.3} parent=0 // pred_region
    _
  $region17: #{encoder_forward.3} parent=0 // pred_fallthru
    _
  // Predicated region
  $region18: #{encoder_forward.3} parent=0 // pred_check
    _
  $region19: #{encoder_forward.3} parent=0 // pred_check_branch
    %24 = sbr.rel (0) target = $region21
  $region20: #{encoder_forward.3} parent=0 // pred_region
    _
  $region21: #{encoder_forward.3} parent=0 // pred_fallthru
    _
  // Predicated region
  $region22: #{encoder_forward.3} parent=0 // pred_check
    _
  $region23: #{encoder_forward.3} parent=0 // pred_check_branch
    %26 = sbr.rel (0) target = $region25
  $region24: #{encoder_forward.3} parent=0 // pred_region
    _
  $region25: #{encoder_forward.3} parent=0 // pred_fallthru
    _
  // Predicated region
  $region26: #{encoder_forward.3} parent=0 // pred_check
    _
  $region27: #{encoder_forward.3} parent=0 // pred_check_branch
    %28 = sbr.rel (0) target = $region29
  $region28: #{encoder_forward.3} parent=0 // pred_region
    _
  $region29: #{encoder_forward.3} parent=0 // pred_fallthru
    _
  %s30 = sld [smem:[#allocation5]]
  %v31 = vld [vmem:[%s2] sm:$0xff]
  %v32 = vld [vmem:[%s2 + $0x8] sm:$0xff]
  %v33 = vld [vmem:[%s2 + $0x10] sm:$0xff]
  %v34 = vld [vmem:[%s2 + $0x18] sm:$0xff]
  %v35 = vld [vmem:[%s2 + $0x20] sm:$0xff]
  %v36 = vld [vmem:[%s2 + $0x28] sm:$0xff]
  %v37 = vld [vmem:[%s2 + $0x30] sm:$0xff]
  %v38 = vld [vmem:[%s2 + $0x38] sm:$0xff]
  %v39 = vpack.c.bf16 %v32, %v31
  %v40 = vpack.c.bf16 %v34, %v33
  %v41 = vpack.c.bf16 %v36, %v35
  %v42 = vpack.c.bf16 %v38, %v37
  %v43 = vld [vmem:[%s3] sm:$0xf]
  %v44 = vld [vmem:[%s3 + $0x4] sm:$0xf]
  %v45 = vld [vmem:[%s3 + $0x8] sm:$0xf]
  %v46 = vld [vmem:[%s3 + $0xc] sm:$0xf]
  %v47 = vld [vmem:[%s3 + $0x10] sm:$0xf]
  %v48 = vld [vmem:[%s3 + $0x14] sm:$0xf]
  %v49 = vld [vmem:[%s3 + $0x18] sm:$0xf]
  %v50 = vld [vmem:[%s3 + $0x1c] sm:$0xf]
  %v51 = vld [vmem:[%s5] sm:$0x1]
  %v53 = vperm.slane %v51, 0
  %v63 = vunpack.c.l.b16 %v43
  %v64 = vunpack.c.l.b16 %v44
  %v65 = vunpack.c.l.b16 %v45
  %v66 = vunpack.c.l.b16 %v46
  %v67 = vunpack.c.l.b16 %v47
  %v68 = vunpack.c.l.b16 %v48
  %v69 = vunpack.c.l.b16 %v49
  %v70 = vunpack.c.l.b16 %v50
  %v71 = vpack.c.b16 %v64, %v63
  %v72 = vpack.c.b16 %v66, %v65
  %v73 = vpack.c.b16 %v68, %v67
  %v74 = vpack.c.b16 %v70, %v69
  %vm79 = vcmask 523264
  %v81 = vsel %vm79, %v39, 0
  %v84 = vsel %vm79, %v40, 0
  %v87 = vsel %vm79, %v41, 0
  %v90 = vsel %vm79, %v42, 0
  %92 = vmatpush.bf16.msra.mxu0 0
  %93 = vmatpush.bf16.msra.mxu0 0
  %94 = vmatpush.bf16.msra.mxu0 0
  %95 = vmatpush.bf16.msra.mxu0 0
  %96 = vmatpush.bf16.msra.mxu0 %v74
  %97 = vmatpush.bf16.msra.mxu0 %v73
  %98 = vmatpush.bf16.msra.mxu0 %v72
  %99 = vmatpush.bf16.msra.mxu0 %v71
  %100 = vmatmul.bf16.gmra.mxu0 %v81
  %v101 = vpop.f32.mrf.mxu0
  %v102 = vadd.f32 %v53, %v101
  %v103 = vpop.f32.mrf.mxu0
  %v104 = vadd.f32 %v53, %v103
  %105 = vmatmul.bf16.gmra.mxu0 %v84
  %v106 = vpop.f32.mrf.mxu0
  %v107 = vadd.f32 %v53, %v106
  %v108 = vpop.f32.mrf.mxu0
  %v109 = vadd.f32 %v53, %v108
  %110 = vmatmul.bf16.gmra.mxu0 %v87
  %v111 = vpop.f32.mrf.mxu0
  %v112 = vadd.f32 %v53, %v111
  %v113 = vpop.f32.mrf.mxu0
  %v114 = vadd.f32 %v53, %v113
  %115 = vmatmul.bf16.gmra.mxu0 %v90
  %v116 = vpop.f32.mrf.mxu0
  %v117 = vadd.f32 %v53, %v116
  %v118 = vpop.f32.mrf.mxu0
  %v119 = vadd.f32 %v53, %v118
  %120 = vdwg.mxu0
  %vm121 = vcmask 785408
  %122 = vst.msk [vmem:[#allocation2] sm:$0xff] %vm121, %v102
  %123 = vst.msk [vmem:[#allocation2 + $0x8] sm:$0xff] %vm121, %v104
  %124 = vst.msk [vmem:[#allocation2 + $0x10] sm:$0xff] %vm121, %v107
  %125 = vst.msk [vmem:[#allocation2 + $0x18] sm:$0xff] %vm121, %v109
  %126 = vst.msk [vmem:[#allocation2 + $0x20] sm:$0xff] %vm121, %v112
  %127 = vst.msk [vmem:[#allocation2 + $0x28] sm:$0xff] %vm121, %v114
  %128 = vst.msk [vmem:[#allocation2 + $0x30] sm:$0xff] %vm121, %v117
  %129 = vst.msk [vmem:[#allocation2 + $0x38] sm:$0xff] %vm121, %v119
  %s130 = scalar_lea.vmem %s3, 32
  %v131 = vld [vmem:[%s130] sm:$0xf]
  %v132 = vld [vmem:[%s130 + $0x4] sm:$0xf]
  %v133 = vld [vmem:[%s130 + $0x8] sm:$0xf]
  %v134 = vld [vmem:[%s130 + $0xc] sm:$0xf]
  %v135 = vld [vmem:[%s130 + $0x10] sm:$0xf]
  %v136 = vld [vmem:[%s130 + $0x14] sm:$0xf]
  %v137 = vld [vmem:[%s130 + $0x18] sm:$0xf]
  %v138 = vld [vmem:[%s130 + $0x1c] sm:$0xf]
  %s139 = scalar_lea.vmem %s5, 1
  %v140 = vld [vmem:[%s139] sm:$0x1]
  %v142 = vperm.slane %v140, 0
  %v152 = vunpack.c.l.b16 %v131
  %v153 = vunpack.c.l.b16 %v132
  %v154 = vunpack.c.l.b16 %v133
  %v155 = vunpack.c.l.b16 %v134
  %v156 = vunpack.c.l.b16 %v135
  %v157 = vunpack.c.l.b16 %v136
  %v158 = vunpack.c.l.b16 %v137
  %v159 = vunpack.c.l.b16 %v138
  %v160 = vpack.c.b16 %v153, %v152
  %v161 = vpack.c.b16 %v155, %v154
  %v162 = vpack.c.b16 %v157, %v156
  %v163 = vpack.c.b16 %v159, %v158
  %168 = vmatpush.bf16.msra.mxu0 0
  %169 = vmatpush.bf16.msra.mxu0 0
  %170 = vmatpush.bf16.msra.mxu0 0
  %171 = vmatpush.bf16.msra.mxu0 0
  %172 = vmatpush.bf16.msra.mxu0 %v163
  %173 = vmatpush.bf16.msra.mxu0 %v162
  %174 = vmatpush.bf16.msra.mxu0 %v161
  %175 = vmatpush.bf16.msra.mxu0 %v160
  %176 = vmatmul.bf16.gmra.mxu0 %v81
  %v177 = vpop.f32.mrf.mxu0
  %v178 = vadd.f32 %v142, %v177
  %v179 = vpop.f32.mrf.mxu0
  %v180 = vadd.f32 %v142, %v179
  %181 = vmatmul.bf16.gmra.mxu0 %v84
  %v182 = vpop.f32.mrf.mxu0
  %v183 = vadd.f32 %v142, %v182
  %v184 = vpop.f32.mrf.mxu0
  %v185 = vadd.f32 %v142, %v184
  %186 = vmatmul.bf16.gmra.mxu0 %v87
  %v187 = vpop.f32.mrf.mxu0
  %v188 = vadd.f32 %v142, %v187
  %v189 = vpop.f32.mrf.mxu0
  %v190 = vadd.f32 %v142, %v189
  %191 = vmatmul.bf16.gmra.mxu0 %v90
  %v192 = vpop.f32.mrf.mxu0
  %v193 = vadd.f32 %v142, %v192
  %v194 = vpop.f32.mrf.mxu0
  %v195 = vadd.f32 %v142, %v194
  %196 = vdwg.mxu0
  %197 = vst.msk [vmem:[#allocation2 + $0x40] sm:$0xff] %vm121, %v178
  %198 = vst.msk [vmem:[#allocation2 + $0x48] sm:$0xff] %vm121, %v180
  %199 = vst.msk [vmem:[#allocation2 + $0x50] sm:$0xff] %vm121, %v183
  %200 = vst.msk [vmem:[#allocation2 + $0x58] sm:$0xff] %vm121, %v185
  %201 = vst.msk [vmem:[#allocation2 + $0x60] sm:$0xff] %vm121, %v188
  %202 = vst.msk [vmem:[#allocation2 + $0x68] sm:$0xff] %vm121, %v190
  %203 = vst.msk [vmem:[#allocation2 + $0x70] sm:$0xff] %vm121, %v193
  %204 = vst.msk [vmem:[#allocation2 + $0x78] sm:$0xff] %vm121, %v195
  %vm205 = vcmask 261120
  %206 = vst.msk [vmem:[#allocation3] sm:$0xff] %vm205, 0.0
  %207 = vst.msk [vmem:[#allocation4] sm:$0xff] %vm205, 0.0
  %v208 = vld [vmem:[%s4] sm:$0xf]
  %v209 = vld [vmem:[%s4 + $0x4] sm:$0xf]
  %v210 = vld [vmem:[%s4 + $0x8] sm:$0xf]
  %v211 = vld [vmem:[%s4 + $0xc] sm:$0xf]
  %s212 = scalar_lea.vmem %s4, 16
  %v213 = vld [vmem:[%s212] sm:$0xf]
  %v214 = vld [vmem:[%s212 + $0x4] sm:$0xf]
  %v215 = vld [vmem:[%s212 + $0x8] sm:$0xf]
  %v216 = vld [vmem:[%s212 + $0xc] sm:$0xf]
  %v217 = vld [vmem:[%s6] sm:$0x1]
  %v219 = vperm.slane %v217, 0
  %s220 = scalar_lea.vmem %s6, 1
  %v221 = vld [vmem:[%s220] sm:$0x1]
  %v223 = vperm.slane %v221, 0
  %v224 = vld [vmem:[%s1] sm:$0xff]
  %225 = vset.pattern.permute.xlu0 0
  %226 = vperm.xlu0 %225, %v224
  %v227 = vpop.permute.xlu0 %226
  // While loop
  $region30: #{encoder_forward.3} parent=0 // loop_pre_header
    _
  $region31: #{encoder_forward.3} parent=0 // loop_header
    %s229 = sphi 0, %s231
    %p230 = scmp.ge.s32.totalorder %s229, %s30
  $region32: #{encoder_forward.3} parent=0 // loop_header_branch
    %233 = sbr.rel (%p230) target = $region36
  $region33: #{encoder_forward.3} parent=0 // loop_body
    %s234 = ssub.s32 %s30, 1
    %s235 = ssub.s32 %s234, %s229
    %s236 = smul.u32 %s229, 8
    %s237 = smul.u32 %s235, 8
    %s238 = sadd.s32 %s237, 64
    %s239 = scalar_lea.vmem [#allocation2], %s236
    %v240 = vld [vmem:[%s239] sm:$0xff]
    %s241 = scalar_lea.vmem [#allocation2], %s238
    %v242 = vld [vmem:[%s241] sm:$0xff]
    %v243 = vld [vmem:[#allocation3] sm:$0xff]
    %v244 = vld [vmem:[#allocation4] sm:$0xff]
    %v245 = vpack.c.bf16 %v243, %v243
    %v250 = vunpack.c.l.b16 %v208
    %v251 = vunpack.c.l.b16 %v209
    %v252 = vunpack.c.l.b16 %v210
    %v253 = vunpack.c.l.b16 %v211
    %v254 = vpack.c.b16 %v251, %v250
    %v255 = vpack.c.b16 %v253, %v252
    %v259 = vsel %vm205, %v245, 0
    %261 = vmatpush.bf16.msra.mxu0 0
    %262 = vmatpush.bf16.msra.mxu0 0
    %263 = vmatpush.bf16.msra.mxu0 0
    %264 = vmatpush.bf16.msra.mxu0 0
    %265 = vmatpush.bf16.msra.mxu0 0
    %266 = vmatpush.bf16.msra.mxu0 0
    %267 = vmatpush.bf16.msra.mxu0 %v255
    %268 = vmatpush.bf16.msra.mxu0 %v254
    %269 = vmatmul.bf16.gmra.mxu0 %v259
    %v270 = vpop.f32.mrf.mxu0
    %v271 = vadd.f32 0.0, %v270
    %v272 = vpop.f32.mrf.mxu0
    %273 = vdwg.mxu0
    %v274 = vadd.f32 %v240, %v271
    %v275 = vxor.u32 %v274, 2147483648
    %v276 = vmul.f32 %v275, 1.442695
    %v277 = vpow.pop %v276
    %v278 = vadd.f32 %v277, 1.0
    %v279 = vrcp.pop %v278
    %v280 = vmul.f32 %v278, %v279
    %v281 = vsub.f32 1.0, %v280
    %v282 = vmul.f32 %v279, %v281
    %v283 = vadd.f32 %v279, %v282
    %vm284 = vweird.f32 %v278
    %vm285 = vweird.f32 %v279
    %vm286 = vmor %vm284, %vm285
    %v287 = vsel %vm286, %v279, %v283
    %v288 = vand.u32 2147483647, %v278
    %vm289 = vcmp.eq.f32.partialorder %v288, 8.507059e+37
    %v290 = vand.u32 %v278, 2147483648
    %v291 = vor.u32 1.1754944e-38, %v290
    %v292 = vsel %vm289, %v291, %v287
    %v293 = vmul.f32 1.0, %v292
    %294 = vrot.lane.b32.xlu0 %v219, 64
    %v295 = vpop.permute.xlu0 %294
    %v297 = vadd.f32 %v271, %v295
    %299 = vrot.lane.b32.xlu0 %v297, 64
    %v300 = vpop.permute.xlu0 %299
    %v302 = vmul.f32 %v293, %v300
    %304 = vrot.lane.b32.xlu0 %v302, 64
    %v305 = vpop.permute.xlu0 %304
    %v307 = vadd.f32 %v240, %v305
    %v308 = vtanh.pop %v307
    %310 = vrot.lane.b32.xlu0 %v308, 64
    %v311 = vpop.permute.xlu0 %310
    %v313 = vsub.f32 %v243, %v311
    %315 = vrot.lane.b32.xlu0 %v313, 32
    %v316 = vpop.permute.xlu0 %315
    %v318 = vmul.f32 %v293, %v316
    %320 = vrot.lane.b32.xlu0 %v318, 32
    %v321 = vpop.permute.xlu0 %320
    %v323 = vadd.f32 %v308, %v321
    %v324 = vpack.c.bf16 %v244, %v244
    %v329 = vunpack.c.l.b16 %v213
    %v330 = vunpack.c.l.b16 %v214
    %v331 = vunpack.c.l.b16 %v215
    %v332 = vunpack.c.l.b16 %v216
    %v333 = vpack.c.b16 %v330, %v329
    %v334 = vpack.c.b16 %v332, %v331
    %v338 = vsel %vm205, %v324, 0
    %340 = vmatpush.bf16.msra.mxu0 0
    %341 = vmatpush.bf16.msra.mxu0 0
    %342 = vmatpush.bf16.msra.mxu0 0
    %343 = vmatpush.bf16.msra.mxu0 0
    %344 = vmatpush.bf16.msra.mxu0 0
    %345 = vmatpush.bf16.msra.mxu0 0
    %346 = vmatpush.bf16.msra.mxu0 %v334
    %347 = vmatpush.bf16.msra.mxu0 %v333
    %348 = vmatmul.bf16.gmra.mxu0 %v338
    %v349 = vpop.f32.mrf.mxu0
    %v350 = vadd.f32 0.0, %v349
    %v351 = vpop.f32.mrf.mxu0
    %352 = vdwg.mxu0
    %v353 = vadd.f32 %v242, %v350
    %v354 = vxor.u32 %v353, 2147483648
    %v355 = vmul.f32 %v354, 1.442695
    %v356 = vpow.pop %v355
    %v357 = vadd.f32 %v356, 1.0
    %v358 = vrcp.pop %v357
    %v359 = vmul.f32 %v357, %v358
    %v360 = vsub.f32 1.0, %v359
    %v361 = vmul.f32 %v358, %v360
    %v362 = vadd.f32 %v358, %v361
    %vm363 = vweird.f32 %v357
    %vm364 = vweird.f32 %v358
    %vm365 = vmor %vm363, %vm364
    %v366 = vsel %vm365, %v358, %v362
    %v367 = vand.u32 2147483647, %v357
    %vm368 = vcmp.eq.f32.partialorder %v367, 8.507059e+37
    %v369 = vand.u32 %v357, 2147483648
    %v370 = vor.u32 1.1754944e-38, %v369
    %v371 = vsel %vm368, %v370, %v366
    %v372 = vmul.f32 1.0, %v371
    %373 = vrot.lane.b32.xlu0 %v223, 64
    %v374 = vpop.permute.xlu0 %373
    %v376 = vadd.f32 %v350, %v374
    %378 = vrot.lane.b32.xlu0 %v376, 64
    %v379 = vpop.permute.xlu0 %378
    %v381 = vmul.f32 %v372, %v379
    %383 = vrot.lane.b32.xlu0 %v381, 64
    %v384 = vpop.permute.xlu0 %383
    %v386 = vadd.f32 %v242, %v384
    %v387 = vtanh.pop %v386
    %389 = vrot.lane.b32.xlu0 %v387, 64
    %v390 = vpop.permute.xlu0 %389
    %v392 = vsub.f32 %v244, %v390
    %394 = vrot.lane.b32.xlu0 %v392, 32
    %v395 = vpop.permute.xlu0 %394
    %v397 = vmul.f32 %v372, %v395
    %399 = vrot.lane.b32.xlu0 %v397, 32
    %v400 = vpop.permute.xlu0 %399
    %v402 = vadd.f32 %v387, %v400
    %v403 = vstv %s229
    %vm404 = vcmp.gt.s32.totalorder %v227, %v403
    %v405 = vstv %s235
    %vm406 = vcmp.gt.s32.totalorder %v227, %v405
    %408 = vrot.lane.b32.xlu0 %v243, 64
    %v409 = vpop.permute.xlu0 %408
    %v411 = vsel %vm404, %v323, %v409
    %413 = vrot.lane.b32.xlu0 %v411, 64
    %v414 = vpop.permute.xlu0 %413
    %416 = vst.msk [vmem:[#allocation3] sm:$0xff] %vm205, %v414
    %418 = vrot.lane.b32.xlu0 %v244, 64
    %v419 = vpop.permute.xlu0 %418
    %v421 = vsel %vm406, %v402, %v419
    %423 = vrot.lane.b32.xlu0 %v421, 64
    %v424 = vpop.permute.xlu0 %423
    %426 = vst.msk [vmem:[#allocation4] sm:$0xff] %vm205, %v424
    %v427 = vsel %vm404, %v323, 0.0
    %429 = vrot.lane.b32.xlu0 %v427, 64
    %v430 = vpop.permute.xlu0 %429
    %s432 = scalar_lea.vmem %s7, %s236
    %433 = vst.msk [vmem:[%s432] sm:$0xff] %vm205, %v430
    %v434 = vsel %vm406, %v402, 0.0
    %436 = vrot.lane.b32.xlu0 %v434, 96
    %v437 = vpop.permute.xlu0 %436
    %s439 = scalar_lea.vmem %s7, %s237
    %vm440 = vcmask 523520
    %441 = vst.msk [vmem:[%s439] sm:$0xff] %vm440, %v437
  $region34: #{encoder_forward.3} parent=0 // loop_footer
    %s231 = sadd.s32 %s229, 1
  $region35: #{encoder_forward.3} parent=0 // loop_footer_branch
    %228 = sbr.rel target = $region31
  $region36: #{encoder_forward.3} parent=0 // loop_exit
    _
  // While loop
  $region37: #{encoder_forward.3} parent=0 // loop_pre_header
    _
  $region38: #{encoder_forward.3} parent=0 // loop_header
    %s443 = sphi %s30, %s445
    %p444 = scmp.ge.s32.totalorder %s443, 70
  $region39: #{encoder_forward.3} parent=0 // loop_header_branch
    %447 = sbr.rel (%p444) target = $region43
  $region40: #{encoder_forward.3} parent=0 // loop_body
    %s448 = smul.u32 %s443, 8
    %s449 = scalar_lea.vmem %s7, %s448
    %450 = vst.msk [vmem:[%s449] sm:$0xff] %vm79, 0.0
  $region41: #{encoder_forward.3} parent=0 // loop_footer
    %s445 = sadd.s32 %s443, 1
  $region42: #{encoder_forward.3} parent=0 // loop_footer_branch
    %442 = sbr.rel target = $region38
  $region43: #{encoder_forward.3} parent=0 // loop_exit
    _
  %v451 = vld [vmem:[#allocation3] sm:$0xff]
  %452 = vst.msk [vmem:[%s8] sm:$0xff] %vm205, %v451
  %v453 = vld [vmem:[#allocation4] sm:$0xff]
  %s454 = scalar_lea.vmem %s8, 8
  %455 = vst.msk [vmem:[%s454] sm:$0xff] %vm205, %v453
  // Predicated region
  $region44: #{encoder_forward.3} parent=0 // pred_check
    _
  $region45: #{encoder_forward.3} parent=0 // pred_check_branch
    %457 = sbr.rel (0) target = $region47
  $region46: #{encoder_forward.3} parent=0 // pred_region
    _
  $region47: #{encoder_forward.3} parent=0 // pred_fallthru
    _
  // Predicated region
  $region48: #{encoder_forward.3} parent=0 // pred_check
    _
  $region49: #{encoder_forward.3} parent=0 // pred_check_branch
    %459 = sbr.rel (0) target = $region51
  $region50: #{encoder_forward.3} parent=0 // pred_region
    _
  $region51: #{encoder_forward.3} parent=0 // pred_fallthru
    _
  // Predicated region
  $region52: #{encoder_forward.3} parent=0 // pred_check
    _
  $region53: #{encoder_forward.3} parent=0 // pred_check_branch
    %461 = sbr.rel (0) target = $region55
  $region54: #{encoder_forward.3} parent=0 // pred_region
    _
  $region55: #{encoder_forward.3} parent=0 // pred_fallthru
    _
  // Predicated region
  $region56: #{encoder_forward.3} parent=0 // pred_check
    _
  $region57: #{encoder_forward.3} parent=0 // pred_check_branch
    %463 = sbr.rel (0) target = $region59
  $region58: #{encoder_forward.3} parent=0 // pred_region
    _
  $region59: #{encoder_forward.3} parent=0 // pred_fallthru
    _

// kernel: encoder_forward.2
$region0: #{encoder_forward.2}
  #allocation0 [shape = 'u32[]', space=smem, size = 0x4, offset = 0x4, fixed_abs, tag = 'smem constant byte address 0x4 - core index']
  #allocation1 [shape = 'u32[72,128]{1,0:T(1,128)}', space=vmem, size = 0x9000, scoped, tag = 'internal scratch']
  #allocation2 [shape = 'f32[128,96]{1,0:T(8,128)}', space=vmem, size = 0x10000, scoped, tag = 'scratch operand']
  #allocation3 [shape = 'f32[8,32]{1,0:T(8,128)}', space=vmem, size = 0x1000, scoped, tag = 'scratch operand']
  #allocation4 [shape = 'f32[8,32]{1,0:T(8,128)}', space=vmem, size = 0x1000, scoped, tag = 'scratch operand']
  #allocation5 [shape = 's32[1]{0:T(128)S(6)}', space=smem, size = 0x200, scoped, tag = 'scoped memory for encoder_forward.2']
  %s0 = inlined_call_operand.<no memory space> [shape: s32[1], index: 0, kind: input, shape index: {}]
  %s1 = inlined_call_operand.vmem [shape: s32[8,1], index: 1, kind: input, shape index: {}]
  %s2 = inlined_call_operand.vmem [shape: f32[64,16], index: 2, kind: input, shape index: {}]
  %s3 = inlined_call_operand.vmem [shape: bf16[2,16,96], index: 3, kind: input, shape index: {}]
  %s4 = inlined_call_operand.vmem [shape: bf16[2,32,96], index: 4, kind: input, shape index: {}]
  %s5 = inlined_call_operand.vmem [shape: f32[2,1,96], index: 5, kind: input, shape index: {}]
  %s6 = inlined_call_operand.vmem [shape: f32[2,1,32], index: 6, kind: input, shape index: {}]
  %s7 = inlined_call_operand.vmem [shape: f32[8,8,64], index: 7, kind: output, shape index: {0}]
  %s8 = inlined_call_operand.hbm [shape: f32[2,8,32], index: 8, kind: output, shape index: {1}]
  %9 = xla_tuple %s7, %s8
  %s10 = sld [smem:[#allocation0]]
  $region60: #{encoder_forward.2} parent=0
    _
  %s12 = ssub.s32 1, %s10
  %s13 = scalar_select 0, %s12, %s10
  %14 = sst [smem:[#allocation5]] %s0
  $region1: #{encoder_forward.2} parent=0
    #allocation6 [shape = 'u8[8192]{0}', space=vmem, size = 0x2000, scoped, tag = 'output window, operand 1, single buffered']
    #allocation7 [shape = 's32[1]{0}', space=sflag, size = 0x4, scoped, tag = 'scoped memory for encoder_forward.2']
    %15 = vsyncpa [#allocation7], 0
    // Predicated region
    $region2: #{encoder_forward.2} parent=1 // pred_check
      _
    $region3: #{encoder_forward.2} parent=1 // pred_check_branch
      %17 = sbr.rel (0) target = $region5
    $region4: #{encoder_forward.2} parent=1 // pred_region
      _
    $region5: #{encoder_forward.2} parent=1 // pred_fallthru
      _
    // Predicated region
    $region6: #{encoder_forward.2} parent=1 // pred_check
      _
    $region7: #{encoder_forward.2} parent=1 // pred_check_branch
      %19 = sbr.rel (0) target = $region9
    $region8: #{encoder_forward.2} parent=1 // pred_region
      _
    $region9: #{encoder_forward.2} parent=1 // pred_fallthru
      _
    // Predicated region
    $region10: #{encoder_forward.2} parent=1 // pred_check
      _
    $region11: #{encoder_forward.2} parent=1 // pred_check_branch
      %21 = sbr.rel (0) target = $region13
    $region12: #{encoder_forward.2} parent=1 // pred_region
      _
    $region13: #{encoder_forward.2} parent=1 // pred_fallthru
      _
    // Predicated region
    $region14: #{encoder_forward.2} parent=1 // pred_check
      _
    $region15: #{encoder_forward.2} parent=1 // pred_check_branch
      %23 = sbr.rel (0) target = $region17
    $region16: #{encoder_forward.2} parent=1 // pred_region
      _
    $region17: #{encoder_forward.2} parent=1 // pred_fallthru
      _
    // Predicated region
    $region18: #{encoder_forward.2} parent=1 // pred_check
      _
    $region19: #{encoder_forward.2} parent=1 // pred_check_branch
      %25 = sbr.rel (0) target = $region21
    $region20: #{encoder_forward.2} parent=1 // pred_region
      _
    $region21: #{encoder_forward.2} parent=1 // pred_fallthru
      _
    // Predicated region
    $region22: #{encoder_forward.2} parent=1 // pred_check
      _
    $region23: #{encoder_forward.2} parent=1 // pred_check_branch
      %27 = sbr.rel (0) target = $region25
    $region24: #{encoder_forward.2} parent=1 // pred_region
      _
    $region25: #{encoder_forward.2} parent=1 // pred_fallthru
      _
    // Predicated region
    $region26: #{encoder_forward.2} parent=1 // pred_check
      _
    $region27: #{encoder_forward.2} parent=1 // pred_check_branch
      %29 = sbr.rel (0) target = $region29
    $region28: #{encoder_forward.2} parent=1 // pred_region
      _
    $region29: #{encoder_forward.2} parent=1 // pred_fallthru
      _
    %s31 = sld [smem:[#allocation5]]
    %v32 = vld [vmem:[%s2] sm:$0xff]
    %v33 = vld [vmem:[%s2 + $0x8] sm:$0xff]
    %v34 = vld [vmem:[%s2 + $0x10] sm:$0xff]
    %v35 = vld [vmem:[%s2 + $0x18] sm:$0xff]
    %v36 = vld [vmem:[%s2 + $0x20] sm:$0xff]
    %v37 = vld [vmem:[%s2 + $0x28] sm:$0xff]
    %v38 = vld [vmem:[%s2 + $0x30] sm:$0xff]
    %v39 = vld [vmem:[%s2 + $0x38] sm:$0xff]
    %v40 = vpack.c.bf16 %v33, %v32
    %v41 = vpack.c.bf16 %v35, %v34
    %v42 = vpack.c.bf16 %v37, %v36
    %v43 = vpack.c.bf16 %v39, %v38
    %v44 = vld [vmem:[%s3] sm:$0xf]
    %v45 = vld [vmem:[%s3 + $0x4] sm:$0xf]
    %v46 = vld [vmem:[%s5] sm:$0x1]
    %v48 = vperm.slane %v46, 0
    %v52 = vunpack.c.l.b16 %v44
    %v53 = vunpack.c.l.b16 %v45
    %v54 = vpack.c.b16 %v53, %v52
    %vm56 = vcmask 130048
    %v58 = vsel %vm56, %v40, 0
    %v61 = vsel %vm56, %v41, 0
    %v64 = vsel %vm56, %v42, 0
    %v67 = vsel %vm56, %v43, 0
    %69 = vmatpush.bf16.msra.mxu0 0
    %70 = vmatpush.bf16.msra.mxu0 0
    %71 = vmatpush.bf16.msra.mxu0 0
    %72 = vmatpush.bf16.msra.mxu0 0
    %73 = vmatpush.bf16.msra.mxu0 0
    %74 = vmatpush.bf16.msra.mxu0 0
    %75 = vmatpush.bf16.msra.mxu0 0
    %76 = vmatpush.bf16.msra.mxu0 %v54
    %77 = vmatmul.bf16.gmra.mxu0 %v58
    %v78 = vpop.f32.mrf.mxu0
    %v79 = vadd.f32 %v48, %v78
    %v80 = vpop.f32.mrf.mxu0
    %v81 = vadd.f32 %v48, %v80
    %82 = vmatmul.bf16.gmra.mxu0 %v61
    %v83 = vpop.f32.mrf.mxu0
    %v84 = vadd.f32 %v48, %v83
    %v85 = vpop.f32.mrf.mxu0
    %v86 = vadd.f32 %v48, %v85
    %87 = vmatmul.bf16.gmra.mxu0 %v64
    %v88 = vpop.f32.mrf.mxu0
    %v89 = vadd.f32 %v48, %v88
    %v90 = vpop.f32.mrf.mxu0
    %v91 = vadd.f32 %v48, %v90
    %92 = vmatmul.bf16.gmra.mxu0 %v67
    %v93 = vpop.f32.mrf.mxu0
    %v94 = vadd.f32 %v48, %v93
    %v95 = vpop.f32.mrf.mxu0
    %v96 = vadd.f32 %v48, %v95
    %97 = vdwg.mxu0
    %vm98 = vcmask 785408
    %99 = vst.msk [vmem:[#allocation2] sm:$0xff] %vm98, %v79
    %100 = vst.msk [vmem:[#allocation2 + $0x8] sm:$0xff] %vm98, %v81
    %101 = vst.msk [vmem:[#allocation2 + $0x10] sm:$0xff] %vm98, %v84
    %102 = vst.msk [vmem:[#allocation2 + $0x18] sm:$0xff] %vm98, %v86
    %103 = vst.msk [vmem:[#allocation2 + $0x20] sm:$0xff] %vm98, %v89
    %104 = vst.msk [vmem:[#allocation2 + $0x28] sm:$0xff] %vm98, %v91
    %105 = vst.msk [vmem:[#allocation2 + $0x30] sm:$0xff] %vm98, %v94
    %106 = vst.msk [vmem:[#allocation2 + $0x38] sm:$0xff] %vm98, %v96
    %s107 = scalar_lea.vmem %s3, 8
    %v108 = vld [vmem:[%s107] sm:$0xf]
    %v109 = vld [vmem:[%s107 + $0x4] sm:$0xf]
    %s110 = scalar_lea.vmem %s5, 1
    %v111 = vld [vmem:[%s110] sm:$0x1]
    %v113 = vperm.slane %v111, 0
    %v117 = vunpack.c.l.b16 %v108
    %v118 = vunpack.c.l.b16 %v109
    %v119 = vpack.c.b16 %v118, %v117
    %121 = vmatpush.bf16.msra.mxu0 0
    %122 = vmatpush.bf16.msra.mxu0 0
    %123 = vmatpush.bf16.msra.mxu0 0
    %124 = vmatpush.bf16.msra.mxu0 0
    %125 = vmatpush.bf16.msra.mxu0 0
    %126 = vmatpush.bf16.msra.mxu0 0
    %127 = vmatpush.bf16.msra.mxu0 0
    %128 = vmatpush.bf16.msra.mxu0 %v119
    %129 = vmatmul.bf16.gmra.mxu0 %v58
    %v130 = vpop.f32.mrf.mxu0
    %v131 = vadd.f32 %v113, %v130
    %v132 = vpop.f32.mrf.mxu0
    %v133 = vadd.f32 %v113, %v132
    %134 = vmatmul.bf16.gmra.mxu0 %v61
    %v135 = vpop.f32.mrf.mxu0
    %v136 = vadd.f32 %v113, %v135
    %v137 = vpop.f32.mrf.mxu0
    %v138 = vadd.f32 %v113, %v137
    %139 = vmatmul.bf16.gmra.mxu0 %v64
    %v140 = vpop.f32.mrf.mxu0
    %v141 = vadd.f32 %v113, %v140
    %v142 = vpop.f32.mrf.mxu0
    %v143 = vadd.f32 %v113, %v142
    %144 = vmatmul.bf16.gmra.mxu0 %v67
    %v145 = vpop.f32.mrf.mxu0
    %v146 = vadd.f32 %v113, %v145
    %v147 = vpop.f32.mrf.mxu0
    %v148 = vadd.f32 %v113, %v147
    %149 = vdwg.mxu0
    %150 = vst.msk [vmem:[#allocation2 + $0x40] sm:$0xff] %vm98, %v131
    %151 = vst.msk [vmem:[#allocation2 + $0x48] sm:$0xff] %vm98, %v133
    %152 = vst.msk [vmem:[#allocation2 + $0x50] sm:$0xff] %vm98, %v136
    %153 = vst.msk [vmem:[#allocation2 + $0x58] sm:$0xff] %vm98, %v138
    %154 = vst.msk [vmem:[#allocation2 + $0x60] sm:$0xff] %vm98, %v141
    %155 = vst.msk [vmem:[#allocation2 + $0x68] sm:$0xff] %vm98, %v143
    %156 = vst.msk [vmem:[#allocation2 + $0x70] sm:$0xff] %vm98, %v146
    %157 = vst.msk [vmem:[#allocation2 + $0x78] sm:$0xff] %vm98, %v148
    %vm158 = vcmask 261120
    %159 = vst.msk [vmem:[#allocation3] sm:$0xff] %vm158, 0.0
    %160 = vst.msk [vmem:[#allocation4] sm:$0xff] %vm158, 0.0
    %v161 = vld [vmem:[%s4] sm:$0xf]
    %v162 = vld [vmem:[%s4 + $0x4] sm:$0xf]
    %v163 = vld [vmem:[%s4 + $0x8] sm:$0xf]
    %v164 = vld [vmem:[%s4 + $0xc] sm:$0xf]
    %s165 = scalar_lea.vmem %s4, 16
    %v166 = vld [vmem:[%s165] sm:$0xf]
    %v167 = vld [vmem:[%s165 + $0x4] sm:$0xf]
    %v168 = vld [vmem:[%s165 + $0x8] sm:$0xf]
    %v169 = vld [vmem:[%s165 + $0xc] sm:$0xf]
    %v170 = vld [vmem:[%s6] sm:$0x1]
    %v172 = vperm.slane %v170, 0
    %s173 = scalar_lea.vmem %s6, 1
    %v174 = vld [vmem:[%s173] sm:$0x1]
    %v176 = vperm.slane %v174, 0
    %v177 = vld [vmem:[%s1] sm:$0xff]
    %178 = vset.pattern.permute.xlu0 0
    %179 = vperm.xlu0 %178, %v177
    %v180 = vpop.permute.xlu0 %179
    // While loop
    $region30: #{encoder_forward.2} parent=1 // loop_pre_header
      _
    $region31: #{encoder_forward.2} parent=1 // loop_header
      %s182 = sphi 0, %s184
      %p183 = scmp.ge.s32.totalorder %s182, %s31
    $region32: #{encoder_forward.2} parent=1 // loop_header_branch
      %186 = sbr.rel (%p183) target = $region36
    $region33: #{encoder_forward.2} parent=1 // loop_body
      %s187 = ssub.s32 %s31, 1
      %s188 = ssub.s32 %s187, %s182
      %s189 = smul.u32 %s182, 8
      %s190 = smul.u32 %s188, 8
      %s191 = sadd.s32 %s190, 64
      %s192 = scalar_lea.vmem [#allocation2], %s189
      %v193 = vld [vmem:[%s192] sm:$0xff]
      %s194 = scalar_lea.vmem [#allocation2], %s191
      %v195 = vld [vmem:[%s194] sm:$0xff]
      %v196 = vld [vmem:[#allocation3] sm:$0xff]
      %v197 = vld [vmem:[#allocation4] sm:$0xff]
      %v198 = vpack.c.bf16 %v196, %v196
      %v203 = vunpack.c.l.b16 %v161
      %v204 = vunpack.c.l.b16 %v162
      %v205 = vunpack.c.l.b16 %v163
      %v206 = vunpack.c.l.b16 %v164
      %v207 = vpack.c.b16 %v204, %v203
      %v208 = vpack.c.b16 %v206, %v205
      %v212 = vsel %vm158, %v198, 0
      %214 = vmatpush.bf16.msra.mxu0 0
      %215 = vmatpush.bf16.msra.mxu0 0
      %216 = vmatpush.bf16.msra.mxu0 0
      %217 = vmatpush.bf16.msra.mxu0 0
      %218 = vmatpush.bf16.msra.mxu0 0
      %219 = vmatpush.bf16.msra.mxu0 0
      %220 = vmatpush.bf16.msra.mxu0 %v208
      %221 = vmatpush.bf16.msra.mxu0 %v207
      %222 = vmatmul.bf16.gmra.mxu0 %v212
      %v223 = vpop.f32.mrf.mxu0
      %v224 = vadd.f32 0.0, %v223
      %v225 = vpop.f32.mrf.mxu0
      %226 = vdwg.mxu0
      %v227 = vadd.f32 %v193, %v224
      %v228 = vxor.u32 %v227, 2147483648
      %v229 = vmul.f32 %v228, 1.442695
      %v230 = vpow.pop %v229
      %v231 = vadd.f32 %v230, 1.0
      %v232 = vrcp.pop %v231
      %v233 = vmul.f32 %v231, %v232
      %v234 = vsub.f32 1.0, %v233
      %v235 = vmul.f32 %v232, %v234
      %v236 = vadd.f32 %v232, %v235
      %vm237 = vweird.f32 %v231
      %vm238 = vweird.f32 %v232
      %vm239 = vmor %vm237, %vm238
      %v240 = vsel %vm239, %v232, %v236
      %v241 = vand.u32 2147483647, %v231
      %vm242 = vcmp.eq.f32.partialorder %v241, 8.507059e+37
      %v243 = vand.u32 %v231, 2147483648
      %v244 = vor.u32 1.1754944e-38, %v243
      %v245 = vsel %vm242, %v244, %v240
      %v246 = vmul.f32 1.0, %v245
      %247 = vrot.lane.b32.xlu0 %v172, 64
      %v248 = vpop.permute.xlu0 %247
      %v250 = vadd.f32 %v224, %v248
      %252 = vrot.lane.b32.xlu0 %v250, 64
      %v253 = vpop.permute.xlu0 %252
      %v255 = vmul.f32 %v246, %v253
      %257 = vrot.lane.b32.xlu0 %v255, 64
      %v258 = vpop.permute.xlu0 %257
      %v260 = vadd.f32 %v193, %v258
      %v261 = vtanh.pop %v260
      %263 = vrot.lane.b32.xlu0 %v261, 64
      %v264 = vpop.permute.xlu0 %263
      %v266 = vsub.f32 %v196, %v264
      %268 = vrot.lane.b32.xlu0 %v266, 32
      %v269 = vpop.permute.xlu0 %268
      %v271 = vmul.f32 %v246, %v269
      %273 = vrot.lane.b32.xlu0 %v271, 32
      %v274 = vpop.permute.xlu0 %273
      %v276 = vadd.f32 %v261, %v274
      %v277 = vpack.c.bf16 %v197, %v197
      %v282 = vunpack.c.l.b16 %v166
      %v283 = vunpack.c.l.b16 %v167
      %v284 = vunpack.c.l.b16 %v168
      %v285 = vunpack.c.l.b16 %v169
      %v286 = vpack.c.b16 %v283, %v282
      %v287 = vpack.c.b16 %v285, %v284
      %v291 = vsel %vm158, %v277, 0
      %293 = vmatpush.bf16.msra.mxu0 0
      %294 = vmatpush.bf16.msra.mxu0 0
      %295 = vmatpush.bf16.msra.mxu0 0
      %296 = vmatpush.bf16.msra.mxu0 0
      %297 = vmatpush.bf16.msra.mxu0 0
      %298 = vmatpush.bf16.msra.mxu0 0
      %299 = vmatpush.bf16.msra.mxu0 %v287
      %300 = vmatpush.bf16.msra.mxu0 %v286
      %301 = vmatmul.bf16.gmra.mxu0 %v291
      %v302 = vpop.f32.mrf.mxu0
      %v303 = vadd.f32 0.0, %v302
      %v304 = vpop.f32.mrf.mxu0
      %305 = vdwg.mxu0
      %v306 = vadd.f32 %v195, %v303
      %v307 = vxor.u32 %v306, 2147483648
      %v308 = vmul.f32 %v307, 1.442695
      %v309 = vpow.pop %v308
      %v310 = vadd.f32 %v309, 1.0
      %v311 = vrcp.pop %v310
      %v312 = vmul.f32 %v310, %v311
      %v313 = vsub.f32 1.0, %v312
      %v314 = vmul.f32 %v311, %v313
      %v315 = vadd.f32 %v311, %v314
      %vm316 = vweird.f32 %v310
      %vm317 = vweird.f32 %v311
      %vm318 = vmor %vm316, %vm317
      %v319 = vsel %vm318, %v311, %v315
      %v320 = vand.u32 2147483647, %v310
      %vm321 = vcmp.eq.f32.partialorder %v320, 8.507059e+37
      %v322 = vand.u32 %v310, 2147483648
      %v323 = vor.u32 1.1754944e-38, %v322
      %v324 = vsel %vm321, %v323, %v319
      %v325 = vmul.f32 1.0, %v324
      %326 = vrot.lane.b32.xlu0 %v176, 64
      %v327 = vpop.permute.xlu0 %326
      %v329 = vadd.f32 %v303, %v327
      %331 = vrot.lane.b32.xlu0 %v329, 64
      %v332 = vpop.permute.xlu0 %331
      %v334 = vmul.f32 %v325, %v332
      %336 = vrot.lane.b32.xlu0 %v334, 64
      %v337 = vpop.permute.xlu0 %336
      %v339 = vadd.f32 %v195, %v337
      %v340 = vtanh.pop %v339
      %342 = vrot.lane.b32.xlu0 %v340, 64
      %v343 = vpop.permute.xlu0 %342
      %v345 = vsub.f32 %v197, %v343
      %347 = vrot.lane.b32.xlu0 %v345, 32
      %v348 = vpop.permute.xlu0 %347
      %v350 = vmul.f32 %v325, %v348
      %352 = vrot.lane.b32.xlu0 %v350, 32
      %v353 = vpop.permute.xlu0 %352
      %v355 = vadd.f32 %v340, %v353
      %v356 = vstv %s182
      %vm357 = vcmp.gt.s32.totalorder %v180, %v356
      %v358 = vstv %s188
      %vm359 = vcmp.gt.s32.totalorder %v180, %v358
      %361 = vrot.lane.b32.xlu0 %v196, 64
      %v362 = vpop.permute.xlu0 %361
      %v364 = vsel %vm357, %v276, %v362
      %366 = vrot.lane.b32.xlu0 %v364, 64
      %v367 = vpop.permute.xlu0 %366
      %369 = vst.msk [vmem:[#allocation3] sm:$0xff] %vm158, %v367
      %371 = vrot.lane.b32.xlu0 %v197, 64
      %v372 = vpop.permute.xlu0 %371
      %v374 = vsel %vm359, %v355, %v372
      %376 = vrot.lane.b32.xlu0 %v374, 64
      %v377 = vpop.permute.xlu0 %376
      %379 = vst.msk [vmem:[#allocation4] sm:$0xff] %vm158, %v377
      %v380 = vsel %vm357, %v276, 0.0
      %382 = vrot.lane.b32.xlu0 %v380, 64
      %v383 = vpop.permute.xlu0 %382
      %s385 = scalar_lea.vmem %s7, %s189
      %386 = vst.msk [vmem:[%s385] sm:$0xff] %vm158, %v383
      %v387 = vsel %vm359, %v355, 0.0
      %389 = vrot.lane.b32.xlu0 %v387, 96
      %v390 = vpop.permute.xlu0 %389
      %s392 = scalar_lea.vmem %s7, %s190
      %vm393 = vcmask 523520
      %394 = vst.msk [vmem:[%s392] sm:$0xff] %vm393, %v390
    $region34: #{encoder_forward.2} parent=1 // loop_footer
      %s184 = sadd.s32 %s182, 1
    $region35: #{encoder_forward.2} parent=1 // loop_footer_branch
      %181 = sbr.rel target = $region31
    $region36: #{encoder_forward.2} parent=1 // loop_exit
      _
    // While loop
    $region37: #{encoder_forward.2} parent=1 // loop_pre_header
      _
    $region38: #{encoder_forward.2} parent=1 // loop_header
      %s396 = sphi %s31, %s398
      %p397 = scmp.ge.s32.totalorder %s396, 8
    $region39: #{encoder_forward.2} parent=1 // loop_header_branch
      %400 = sbr.rel (%p397) target = $region43
    $region40: #{encoder_forward.2} parent=1 // loop_body
      %s401 = smul.u32 %s396, 8
      %s402 = scalar_lea.vmem %s7, %s401
      %vm403 = vcmask 523264
      %404 = vst.msk [vmem:[%s402] sm:$0xff] %vm403, 0.0
    $region41: #{encoder_forward.2} parent=1 // loop_footer
      %s398 = sadd.s32 %s396, 1
    $region42: #{encoder_forward.2} parent=1 // loop_footer_branch
      %395 = sbr.rel target = $region38
    $region43: #{encoder_forward.2} parent=1 // loop_exit
      _
    %v405 = vld [vmem:[#allocation3] sm:$0xff]
    %406 = vst.msk [vmem:[#allocation6] sm:$0xff] %vm158, %v405
    %v407 = vld [vmem:[#allocation4] sm:$0xff]
    %s408 = scalar_lea.vmem [#allocation6], 8
    %409 = vst.msk [vmem:[%s408] sm:$0xff] %vm158, %v407
    // Predicated region
    $region44: #{encoder_forward.2} parent=1 // pred_check
      _
    $region45: #{encoder_forward.2} parent=1 // pred_check_branch
      %411 = sbr.rel (0) target = $region47
    $region46: #{encoder_forward.2} parent=1 // pred_region
      _
    $region47: #{encoder_forward.2} parent=1 // pred_fallthru
      _
    // Predicated region
    $region48: #{encoder_forward.2} parent=1 // pred_check
      _
    $region49: #{encoder_forward.2} parent=1 // pred_check_branch
      %413 = sbr.rel (0) target = $region51
    $region50: #{encoder_forward.2} parent=1 // pred_region
      %415 = vsyncadd [#allocation7], 0
      %s416 = sshll.u32 [#allocation6], 4
      %s417 = int_to_ptr.vmem [resolvable:$true] %s416
      %s418 = sshll.u32 %s8, 4
      %s419 = int_to_ptr.hbm [resolvable:$true] %s418
      %424 = dma.vmem_to_hbm [thread:$0]  %s417, 256, %s419, [#allocation7], 128, 128, 8
    $region51: #{encoder_forward.2} parent=1 // pred_fallthru
      _
    // Predicated region
    $region52: #{encoder_forward.2} parent=1 // pred_check
      _
    $region53: #{encoder_forward.2} parent=1 // pred_check_branch
      %426 = sbr.rel (0) target = $region55
    $region54: #{encoder_forward.2} parent=1 // pred_region
      _
    $region55: #{encoder_forward.2} parent=1 // pred_fallthru
      _
    // Predicated region
    $region56: #{encoder_forward.2} parent=1 // pred_check
      _
    $region57: #{encoder_forward.2} parent=1 // pred_check_branch
      %428 = sbr.rel (0) target = $region59
    $region58: #{encoder_forward.2} parent=1 // pred_region
      %430 = dma.done [#allocation7], 256
    $region59: #{encoder_forward.2} parent=1 // pred_fallthru
      _
    %431 = vsyncpa [#allocation7], 1

</llo_original>
